<compile_context>
chip_gen: v7x
topology: tpu7x:2x2x1
jax: 0.10.0
libtpu: 0.0.40
codegen_flags: <defaults>
</compile_context>

<pallas_src>
import jax
import jax.numpy as jnp
from jax.experimental import pallas as pl
from jax.experimental.pallas import tpu as pltpu


# ------------------------------- kernel ------------------------------------


def _make_kernel(h, th, w_valid, compute_dtype):
    """Builds the fused Sobel + max + L1 partial-sum kernel for one row tile."""

    def kernel(ac, au, ad, bc, bu, bd, fc, fu, fd, o_ref):
        w_pad = ac.shape[2]
        ti = pl.program_id(1)
        row = jax.lax.broadcasted_iota(jnp.int32, (th, w_pad), 0)
        col = jax.lax.broadcasted_iota(jnp.int32, (th, w_pad), 1)
        valid_rows = jnp.minimum(th, h - ti * th)   # rows of this tile inside H
        have_up = ti > 0                            # global row r0-1 exists
        have_dn = (ti + 1) * th < h                 # global row r0+TH exists

        def lshift(x):   # x[:, c-1] with x[:, -1] := 0   (conv zero pad)
            return jnp.where(col == 0, 0.0, pltpu.roll(x, shift=1, axis=1))

        def rshift(x):   # x[:, c+1] with x[:, W] := 0
            return jnp.where(col == w_pad - 1, 0.0,
                             pltpu.roll(x, shift=w_pad - 1, axis=1))

        def sobel_abs(c_ref, u_ref, d_ref):
            p = c_ref[0].astype(compute_dtype)
            # Zero rows past the image bottom (partial last tile): they then
            # act exactly like the conv's zero padding for the last valid row.
            p = jnp.where(row < valid_rows, p, 0.0)

            halo = u_ref.shape[1]
            top = jnp.where(
                have_up, u_ref[0][halo - 1:halo, :].astype(compute_dtype), 0.0)
            bot = jnp.where(
                have_dn, d_ref[0][0:1, :].astype(compute_dtype), 0.0)

            # Vertical neighbours: sublane roll (XLU) + single-row halo fix-up.
            p_up = jnp.where(row == 0, top, pltpu.roll(p, shift=1, axis=0))
            p_dn = jnp.where(row == th - 1, bot,
                             pltpu.roll(p, shift=th - 1, axis=0))

            vs = p_up + 2.0 * p + p_dn    # [1, 2, 1]^T  (vertical smooth)
            vd = p_up - p_dn              # [1, 0,-1]^T  (vertical derivative)

            # PyTorch conv2d is cross-correlation (no kernel flip):
            #   Kx = [1,2,1]^T (x) [-1,0,1]  ->  gx = vs[:,c+1] - vs[:,c-1]
            #   Ky = [1,0,-1]^T (x) [1,2,1]  ->  gy = vd[:,c-1] + 2 vd + vd[:,c+1]
            gx = rshift(vs) - lshift(vs)
            gy = lshift(vd) + 2.0 * vd + rshift(vd)
            return jnp.abs(gx) + jnp.abs(gy)

        grad_a = sobel_abs(ac, au, ad)
        grad_b = sobel_abs(bc, bu, bd)
        grad_f = sobel_abs(fc, fu, fd)

        diff = jnp.abs(grad_f - jnp.maximum(grad_a, grad_b))
        keep = (row < valid_rows) & (col < w_valid)   # mask W pad / partial rows
        diff = jnp.where(keep, diff, 0.0)
        tile_sum = jnp.sum(diff.astype(jnp.float32))  # accumulate in f32

        # One lane-dense (8,128) tile per grid step carrying this tile's L1 sum.
        o_ref[...] = jnp.zeros(o_ref.shape, o_ref.dtype) + tile_sum

    return kernel


# ------------------------------- wrapper ------------------------------------

_TILE_TARGET_BYTES = 2 << 20   # per-image center row-tile, counted in f32 temps


def _round_up(x, m):
    return -(-x // m) * m


def _pick_tile_rows(n, h, w, granule):
    """Row-tile height: multiple of `granule`, big enough to amortize halo DMAs
    and per-step overhead, small enough to bound VMEM and keep >= ~8 grid steps
    (pipelining + both v7x TensorCores)."""
    budget = max(granule,
                 (_TILE_TARGET_BYTES // (4 * max(w, 1))) // granule * granule)
    th = min(budget, _round_up(h, granule))
    min_steps = 8
    if n * pl.cdiv(h, th) < min_steps:
        want_tiles = pl.cdiv(min_steps, max(n, 1))
        th_cap = _round_up(pl.cdiv(h, want_tiles), granule)
        th = max(granule, min(th, th_cap))
    return th


def _vmem_limit_bytes():
    """Explicit VMEM limit (scoped defaults are only 16/32 MiB)."""
    cap = 64 << 20
    try:
        info = pltpu.get_tpu_info()
        for name in ("vmem_capacity_bytes", "vmem_size_bytes", "vmem_bytes"):
            v = getattr(info, name, None)
            if v:
                cap = int(v)
                break
    except Exception:
        pass
    return int(max(32 << 20, min(cap * 3 // 4, 96 << 20)))


def l_grad(image_a, image_b, image_fused, *, tile_rows=None,
           compute_dtype=jnp.float32):
    """Fused Pallas L_Grad: mean |grad(F) - max(grad(A), grad(B))|."""
    n, ch, h, w = image_a.shape
    assert ch == 1, "Sobelxy conv weight is (1,1,3,3) => single input channel"
    assert image_b.shape == image_a.shape
    assert image_fused.shape == image_a.shape

    itemsize = max(image_a.dtype.itemsize, image_b.dtype.itemsize,
                   image_fused.dtype.itemsize)
    granule = {1: 32, 2: 16}.get(itemsize, 8)   # sublane tile for input dtype

    # Lane-dense tiles: pad W to a multiple of 128.  The first padded column is
    # zero, which IS the conv's right-edge zero padding; padded columns are
    # masked out of the loss inside the kernel.
    w_pad = _round_up(w, 128)

    if h <= granule:
        th, halo = h, h                           # single tile, halos unused
    else:
        th = (_pick_tile_rows(n, h, w_pad, granule)
              if tile_rows is None else int(tile_rows))
        assert th > 0 and th % granule == 0, (
            "tile_rows must be a positive multiple of %d" % granule)
        halo = granule
    n_tiles = pl.cdiv(h, th)                      # last tile may be partial
    stride = max(th // halo, 1)                   # halo blocks per center tile

    def _as2d(x):
        x = x.reshape(n, h, w)                    # native dtype; cast in-kernel
        if w_pad != w:
            x = jnp.pad(x, ((0, 0), (0, 0), (0, w_pad - w)))
        return x

    a2, b2, f2 = _as2d(image_a), _as2d(image_b), _as2d(image_fused)

    center = pl.BlockSpec((1, th, w_pad), lambda bi, ti: (bi, ti, 0))
    up = pl.BlockSpec(
        (1, halo, w_pad),
        lambda bi, ti: (bi, jnp.maximum(ti * stride - 1, 0), 0))
    down = pl.BlockSpec(
        (1, halo, w_pad),
        lambda bi, ti: (bi, jnp.where(ti + 1 < n_tiles, (ti + 1) * stride, 0), 0))

    kernel = _make_kernel(h=h, th=th, w_valid=w, compute_dtype=compute_dtype)

    in_bytes = sum(int(x.size) * x.dtype.itemsize for x in (a2, b2, f2))
    cost = pl.CostEstimate(
        flops=int(60 * n * h * w_pad),
        transcendentals=0,
        bytes_accessed=int(in_bytes + n * n_tiles * 8 * 128 * 4))

    partial = pl.pallas_call(
        kernel,
        out_shape=jax.ShapeDtypeStruct((n, n_tiles, 8, 128), jnp.float32),
        grid_spec=pltpu.PrefetchScalarGridSpec(
            num_scalar_prefetch=0,
            grid=(n, n_tiles),
            in_specs=[center, up, down] * 3,
            out_specs=pl.BlockSpec((1, 1, 8, 128),
                                   lambda bi, ti: (bi, ti, 0, 0)),
        ),
        compiler_params=pltpu.CompilerParams(
            dimension_semantics=("parallel", "parallel"),
            vmem_limit_bytes=_vmem_limit_bytes()),
        cost_estimate=cost,
    )(a2, a2, a2, b2, b2, b2, f2, f2, f2)

    # Every (8,128) output tile is a broadcast of that tile's scalar L1 sum.
    total = jnp.sum(partial) * (1.0 / 1024.0)
    return total / (n * ch * h * w)


# ------------------------- pure-JAX reference --------------------------------


def _sobelxy_ref(x):
    kx = jnp.array([[-1., 0., 1.], [-2., 0., 2.], [-1., 0., 1.]], jnp.float32)
    ky = jnp.array([[1., 2., 1.], [0., 0., 0.], [-1., -2., -1.]], jnp.float32)
    n, c, h, w = x.shape
    xp = jnp.pad(x.astype(jnp.float32), ((0, 0), (0, 0), (1, 1), (1, 1)))
    gx = jnp.zeros(x.shape, jnp.float32)
    gy = jnp.zeros(x.shape, jnp.float32)
    for di in range(3):
        for dj in range(3):
            patch = xp[:, :, di:di + h, dj:dj + w]
            gx = gx + kx[di, dj] * patch
            gy = gy + ky[di, dj] * patch
    return jnp.abs(gx) + jnp.abs(gy)


def l_grad_ref(image_a, image_b, image_fused):
    ga = _sobelxy_ref(image_a)
    gb = _sobelxy_ref(image_b)
    gf = _sobelxy_ref(image_fused)
    return jnp.mean(jnp.abs(gf - jnp.maximum(ga, gb)))


if __name__ == "__main__":
    key = jax.random.PRNGKey(0)
    ka, kb, kf = jax.random.split(key, 3)
    shape = (2, 1, 16, 16)
    image_A = jax.random.normal(ka, shape, dtype=jnp.float32)
    image_B = jax.random.normal(kb, shape, dtype=jnp.float32)
    image_F = jax.random.normal(kf, shape, dtype=jnp.float32)

    # Auto tiling: 8-row tiles -> exercises the halo path and min-step capping.
    loss = l_grad(image_A, image_B, image_F)
    jax.block_until_ready(loss)
    loss_ref = l_grad_ref(image_A, image_B, image_F)
    assert loss.shape == ()
    assert jnp.allclose(loss, loss_ref, atol=1e-5, rtol=1e-4), (loss, loss_ref)

    # Single full-height tile (halo blocks fetched but never consumed).
    loss_full = l_grad(image_A, image_B, image_F, tile_rows=16)
    jax.block_until_ready(loss_full)
    assert jnp.allclose(loss_full, loss_ref, atol=1e-5, rtol=1e-4), (
        loss_full, loss_ref)

    # H not a multiple of the tile: exercises the masked partial last tile
    # (the whole-image fallback is gone).
    shape2 = (1, 1, 20, 16)
    k2a, k2b, k2f = jax.random.split(jax.random.PRNGKey(1), 3)
    A2 = jax.random.normal(k2a, shape2, dtype=jnp.float32)
    B2 = jax.random.normal(k2b, shape2, dtype=jnp.float32)
    F2 = jax.random.normal(k2f, shape2, dtype=jnp.float32)
    loss2 = l_grad(A2, B2, F2)
    jax.block_until_ready(loss2)
    loss2_ref = l_grad_ref(A2, B2, F2)
    assert jnp.allclose(loss2, loss2_ref, atol=1e-5, rtol=1e-4), (
        loss2, loss2_ref)

    print("KERNEL_OK")
</pallas_src>

<mosaic_0001>
module attributes {stable_mosaic.version = 11 : i64} {
  func.func @kernel(%arg0: i32, %arg1: i32, %arg2: memref<1x8x128xf32, #tpu.memory_space<vmem>>, %arg3: memref<1x8x128xf32, #tpu.memory_space<vmem>>, %arg4: memref<1x8x128xf32, #tpu.memory_space<vmem>>, %arg5: memref<1x8x128xf32, #tpu.memory_space<vmem>>, %arg6: memref<1x8x128xf32, #tpu.memory_space<vmem>>, %arg7: memref<1x8x128xf32, #tpu.memory_space<vmem>>, %arg8: memref<1x8x128xf32, #tpu.memory_space<vmem>>, %arg9: memref<1x8x128xf32, #tpu.memory_space<vmem>>, %arg10: memref<1x8x128xf32, #tpu.memory_space<vmem>>, %arg11: memref<1x1x8x128xf32, #tpu.memory_space<vmem>>) attributes {dimension_semantics = [#tpu.dimension_semantics<parallel>, #tpu.dimension_semantics<parallel>], iteration_bounds = array<i64: 2, 2>, scalar_prefetch = 0 : i64, scratch_operands = 0 : i64, tpu.core_type = #tpu.core_type<tc>, window_params = [{transform_indices = @transform_0, window_bounds = array<i64: 1, 8, 128>}, {transform_indices = @transform_1, window_bounds = array<i64: 1, 8, 128>}, {transform_indices = @transform_2, window_bounds = array<i64: 1, 8, 128>}, {transform_indices = @transform_3, window_bounds = array<i64: 1, 8, 128>}, {transform_indices = @transform_4, window_bounds = array<i64: 1, 8, 128>}, {transform_indices = @transform_5, window_bounds = array<i64: 1, 8, 128>}, {transform_indices = @transform_6, window_bounds = array<i64: 1, 8, 128>}, {transform_indices = @transform_7, window_bounds = array<i64: 1, 8, 128>}, {transform_indices = @transform_8, window_bounds = array<i64: 1, 8, 128>}, {transform_indices = @transform_9, window_bounds = array<i64: 1, 1, 8, 128>}]} {
    %0 = tpu.iota {dimensions = array<i32: 0>} : vector<8x128xi32>
    %1 = tpu.iota {dimensions = array<i32: 1>} : vector<8x128xi32>
    %c8_i32 = arith.constant 8 : i32
    %2 = arith.muli %arg1, %c8_i32 : i32
    %c16_i32 = arith.constant 16 : i32
    %3 = arith.subi %c16_i32, %2 : i32
    %c8_i32_0 = arith.constant 8 : i32
    %4 = arith.minsi %c8_i32_0, %3 : i32
    %c0_i32 = arith.constant 0 : i32
    %5 = arith.cmpi sgt, %arg1, %c0_i32 : i32
    %c1_i32 = arith.constant 1 : i32
    %6 = arith.addi %arg1, %c1_i32 : i32
    %c8_i32_1 = arith.constant 8 : i32
    %7 = arith.muli %6, %c8_i32_1 : i32
    %c16_i32_2 = arith.constant 16 : i32
    %8 = arith.cmpi slt, %7, %c16_i32_2 : i32
    %c0 = arith.constant 0 : index
    %c0_3 = arith.constant 0 : index
    %c0_4 = arith.constant 0 : index
    %9 = vector.load %arg2[%c0, %c0_3, %c0_4] : memref<1x8x128xf32, #tpu.memory_space<vmem>>, vector<1x8x128xf32>
    %10 = vector.shape_cast %9 : vector<1x8x128xf32> to vector<8x128xf32>
    %11 = vector.broadcast %4 : i32 to vector<8x128xi32>
    %12 = arith.cmpi slt, %0, %11 : vector<8x128xi32>
    %cst = arith.constant 0.000000e+00 : f32
    %13 = vector.broadcast %cst : f32 to vector<8x128xf32>
    %14 = arith.select %12, %10, %13 : vector<8x128xi1>, vector<8x128xf32>
    %c0_5 = arith.constant 0 : index
    %c0_6 = arith.constant 0 : index
    %c0_7 = arith.constant 0 : index
    %15 = vector.load %arg3[%c0_5, %c0_6, %c0_7] : memref<1x8x128xf32, #tpu.memory_space<vmem>>, vector<1x8x128xf32>
    %16 = vector.shape_cast %15 : vector<1x8x128xf32> to vector<8x128xf32>
    %17 = vector.extract_strided_slice %16 {offsets = [7, 0], sizes = [1, 128], strides = [1, 1]} : vector<8x128xf32> to vector<1x128xf32>
    %cst_8 = arith.constant 0.000000e+00 : f32
    %18 = vector.broadcast %cst_8 : f32 to vector<1x128xf32>
    %19 = arith.select %5, %17, %18 : vector<1x128xf32>
    %c0_9 = arith.constant 0 : index
    %c0_10 = arith.constant 0 : index
    %c0_11 = arith.constant 0 : index
    %20 = vector.load %arg4[%c0_9, %c0_10, %c0_11] : memref<1x8x128xf32, #tpu.memory_space<vmem>>, vector<1x8x128xf32>
    %21 = vector.shape_cast %20 : vector<1x8x128xf32> to vector<8x128xf32>
    %22 = vector.extract_strided_slice %21 {offsets = [0, 0], sizes = [1, 128], strides = [1, 1]} : vector<8x128xf32> to vector<1x128xf32>
    %cst_12 = arith.constant 0.000000e+00 : f32
    %23 = vector.broadcast %cst_12 : f32 to vector<1x128xf32>
    %24 = arith.select %8, %22, %23 : vector<1x128xf32>
    %c0_i32_13 = arith.constant 0 : i32
    %25 = vector.broadcast %c0_i32_13 : i32 to vector<8x128xi32>
    %26 = arith.cmpi eq, %0, %25 : vector<8x128xi32>
    %c1_i32_14 = arith.constant 1 : i32
    %27 = tpu.dynamic_rotate %14 by %c1_i32_14 dim 0 : vector<8x128xf32>, i32 -> vector<8x128xf32>
    %28 = vector.shape_cast %19 : vector<1x128xf32> to vector<1x128xf32>
    %29 = vector.broadcast %28 : vector<1x128xf32> to vector<8x128xf32>
    %30 = arith.select %26, %29, %27 : vector<8x128xi1>, vector<8x128xf32>
    %c7_i32 = arith.constant 7 : i32
    %31 = vector.broadcast %c7_i32 : i32 to vector<8x128xi32>
    %32 = arith.cmpi eq, %0, %31 : vector<8x128xi32>
    %c7_i32_15 = arith.constant 7 : i32
    %33 = tpu.dynamic_rotate %14 by %c7_i32_15 dim 0 : vector<8x128xf32>, i32 -> vector<8x128xf32>
    %34 = vector.shape_cast %24 : vector<1x128xf32> to vector<1x128xf32>
    %35 = vector.broadcast %34 : vector<1x128xf32> to vector<8x128xf32>
    %36 = arith.select %32, %35, %33 : vector<8x128xi1>, vector<8x128xf32>
    %cst_16 = arith.constant 2.000000e+00 : f32
    %37 = vector.broadcast %cst_16 : f32 to vector<8x128xf32>
    %38 = arith.mulf %37, %14 : vector<8x128xf32>
    %39 = arith.addf %30, %38 : vector<8x128xf32>
    %40 = arith.addf %39, %36 : vector<8x128xf32>
    %41 = arith.subf %30, %36 : vector<8x128xf32>
    %c127_i32 = arith.constant 127 : i32
    %42 = vector.broadcast %c127_i32 : i32 to vector<8x128xi32>
    %43 = arith.cmpi eq, %1, %42 : vector<8x128xi32>
    %c127_i32_17 = arith.constant 127 : i32
    %44 = tpu.dynamic_rotate %40 by %c127_i32_17 dim 1 : vector<8x128xf32>, i32 -> vector<8x128xf32>
    %cst_18 = arith.constant 0.000000e+00 : f32
    %45 = vector.broadcast %cst_18 : f32 to vector<8x128xf32>
    %46 = arith.select %43, %45, %44 : vector<8x128xi1>, vector<8x128xf32>
    %c0_i32_19 = arith.constant 0 : i32
    %47 = vector.broadcast %c0_i32_19 : i32 to vector<8x128xi32>
    %48 = arith.cmpi eq, %1, %47 : vector<8x128xi32>
    %c1_i32_20 = arith.constant 1 : i32
    %49 = tpu.dynamic_rotate %40 by %c1_i32_20 dim 1 : vector<8x128xf32>, i32 -> vector<8x128xf32>
    %cst_21 = arith.constant 0.000000e+00 : f32
    %50 = vector.broadcast %cst_21 : f32 to vector<8x128xf32>
    %51 = arith.select %48, %50, %49 : vector<8x128xi1>, vector<8x128xf32>
    %52 = arith.subf %46, %51 : vector<8x128xf32>
    %c0_i32_22 = arith.constant 0 : i32
    %53 = vector.broadcast %c0_i32_22 : i32 to vector<8x128xi32>
    %54 = arith.cmpi eq, %1, %53 : vector<8x128xi32>
    %c1_i32_23 = arith.constant 1 : i32
    %55 = tpu.dynamic_rotate %41 by %c1_i32_23 dim 1 : vector<8x128xf32>, i32 -> vector<8x128xf32>
    %cst_24 = arith.constant 0.000000e+00 : f32
    %56 = vector.broadcast %cst_24 : f32 to vector<8x128xf32>
    %57 = arith.select %54, %56, %55 : vector<8x128xi1>, vector<8x128xf32>
    %cst_25 = arith.constant 2.000000e+00 : f32
    %58 = vector.broadcast %cst_25 : f32 to vector<8x128xf32>
    %59 = arith.mulf %58, %41 : vector<8x128xf32>
    %60 = arith.addf %57, %59 : vector<8x128xf32>
    %c127_i32_26 = arith.constant 127 : i32
    %61 = vector.broadcast %c127_i32_26 : i32 to vector<8x128xi32>
    %62 = arith.cmpi eq, %1, %61 : vector<8x128xi32>
    %c127_i32_27 = arith.constant 127 : i32
    %63 = tpu.dynamic_rotate %41 by %c127_i32_27 dim 1 : vector<8x128xf32>, i32 -> vector<8x128xf32>
    %cst_28 = arith.constant 0.000000e+00 : f32
    %64 = vector.broadcast %cst_28 : f32 to vector<8x128xf32>
    %65 = arith.select %62, %64, %63 : vector<8x128xi1>, vector<8x128xf32>
    %66 = arith.addf %60, %65 : vector<8x128xf32>
    %67 = math.absf %52 : vector<8x128xf32>
    %68 = math.absf %66 : vector<8x128xf32>
    %69 = arith.addf %67, %68 : vector<8x128xf32>
    %c0_29 = arith.constant 0 : index
    %c0_30 = arith.constant 0 : index
    %c0_31 = arith.constant 0 : index
    %70 = vector.load %arg5[%c0_29, %c0_30, %c0_31] : memref<1x8x128xf32, #tpu.memory_space<vmem>>, vector<1x8x128xf32>
    %71 = vector.shape_cast %70 : vector<1x8x128xf32> to vector<8x128xf32>
    %72 = vector.broadcast %4 : i32 to vector<8x128xi32>
    %73 = arith.cmpi slt, %0, %72 : vector<8x128xi32>
    %cst_32 = arith.constant 0.000000e+00 : f32
    %74 = vector.broadcast %cst_32 : f32 to vector<8x128xf32>
    %75 = arith.select %73, %71, %74 : vector<8x128xi1>, vector<8x128xf32>
    %c0_33 = arith.constant 0 : index
    %c0_34 = arith.constant 0 : index
    %c0_35 = arith.constant 0 : index
    %76 = vector.load %arg6[%c0_33, %c0_34, %c0_35] : memref<1x8x128xf32, #tpu.memory_space<vmem>>, vector<1x8x128xf32>
    %77 = vector.shape_cast %76 : vector<1x8x128xf32> to vector<8x128xf32>
    %78 = vector.extract_strided_slice %77 {offsets = [7, 0], sizes = [1, 128], strides = [1, 1]} : vector<8x128xf32> to vector<1x128xf32>
    %cst_36 = arith.constant 0.000000e+00 : f32
    %79 = vector.broadcast %cst_36 : f32 to vector<1x128xf32>
    %80 = arith.select %5, %78, %79 : vector<1x128xf32>
    %c0_37 = arith.constant 0 : index
    %c0_38 = arith.constant 0 : index
    %c0_39 = arith.constant 0 : index
    %81 = vector.load %arg7[%c0_37, %c0_38, %c0_39] : memref<1x8x128xf32, #tpu.memory_space<vmem>>, vector<1x8x128xf32>
    %82 = vector.shape_cast %81 : vector<1x8x128xf32> to vector<8x128xf32>
    %83 = vector.extract_strided_slice %82 {offsets = [0, 0], sizes = [1, 128], strides = [1, 1]} : vector<8x128xf32> to vector<1x128xf32>
    %cst_40 = arith.constant 0.000000e+00 : f32
    %84 = vector.broadcast %cst_40 : f32 to vector<1x128xf32>
    %85 = arith.select %8, %83, %84 : vector<1x128xf32>
    %c0_i32_41 = arith.constant 0 : i32
    %86 = vector.broadcast %c0_i32_41 : i32 to vector<8x128xi32>
    %87 = arith.cmpi eq, %0, %86 : vector<8x128xi32>
    %c1_i32_42 = arith.constant 1 : i32
    %88 = tpu.dynamic_rotate %75 by %c1_i32_42 dim 0 : vector<8x128xf32>, i32 -> vector<8x128xf32>
    %89 = vector.shape_cast %80 : vector<1x128xf32> to vector<1x128xf32>
    %90 = vector.broadcast %89 : vector<1x128xf32> to vector<8x128xf32>
    %91 = arith.select %87, %90, %88 : vector<8x128xi1>, vector<8x128xf32>
    %c7_i32_43 = arith.constant 7 : i32
    %92 = vector.broadcast %c7_i32_43 : i32 to vector<8x128xi32>
    %93 = arith.cmpi eq, %0, %92 : vector<8x128xi32>
    %c7_i32_44 = arith.constant 7 : i32
    %94 = tpu.dynamic_rotate %75 by %c7_i32_44 dim 0 : vector<8x128xf32>, i32 -> vector<8x128xf32>
    %95 = vector.shape_cast %85 : vector<1x128xf32> to vector<1x128xf32>
    %96 = vector.broadcast %95 : vector<1x128xf32> to vector<8x128xf32>
    %97 = arith.select %93, %96, %94 : vector<8x128xi1>, vector<8x128xf32>
    %cst_45 = arith.constant 2.000000e+00 : f32
    %98 = vector.broadcast %cst_45 : f32 to vector<8x128xf32>
    %99 = arith.mulf %98, %75 : vector<8x128xf32>
    %100 = arith.addf %91, %99 : vector<8x128xf32>
    %101 = arith.addf %100, %97 : vector<8x128xf32>
    %102 = arith.subf %91, %97 : vector<8x128xf32>
    %c127_i32_46 = arith.constant 127 : i32
    %103 = vector.broadcast %c127_i32_46 : i32 to vector<8x128xi32>
    %104 = arith.cmpi eq, %1, %103 : vector<8x128xi32>
    %c127_i32_47 = arith.constant 127 : i32
    %105 = tpu.dynamic_rotate %101 by %c127_i32_47 dim 1 : vector<8x128xf32>, i32 -> vector<8x128xf32>
    %cst_48 = arith.constant 0.000000e+00 : f32
    %106 = vector.broadcast %cst_48 : f32 to vector<8x128xf32>
    %107 = arith.select %104, %106, %105 : vector<8x128xi1>, vector<8x128xf32>
    %c0_i32_49 = arith.constant 0 : i32
    %108 = vector.broadcast %c0_i32_49 : i32 to vector<8x128xi32>
    %109 = arith.cmpi eq, %1, %108 : vector<8x128xi32>
    %c1_i32_50 = arith.constant 1 : i32
    %110 = tpu.dynamic_rotate %101 by %c1_i32_50 dim 1 : vector<8x128xf32>, i32 -> vector<8x128xf32>
    %cst_51 = arith.constant 0.000000e+00 : f32
    %111 = vector.broadcast %cst_51 : f32 to vector<8x128xf32>
    %112 = arith.select %109, %111, %110 : vector<8x128xi1>, vector<8x128xf32>
    %113 = arith.subf %107, %112 : vector<8x128xf32>
    %c0_i32_52 = arith.constant 0 : i32
    %114 = vector.broadcast %c0_i32_52 : i32 to vector<8x128xi32>
    %115 = arith.cmpi eq, %1, %114 : vector<8x128xi32>
    %c1_i32_53 = arith.constant 1 : i32
    %116 = tpu.dynamic_rotate %102 by %c1_i32_53 dim 1 : vector<8x128xf32>, i32 -> vector<8x128xf32>
    %cst_54 = arith.constant 0.000000e+00 : f32
    %117 = vector.broadcast %cst_54 : f32 to vector<8x128xf32>
    %118 = arith.select %115, %117, %116 : vector<8x128xi1>, vector<8x128xf32>
    %cst_55 = arith.constant 2.000000e+00 : f32
    %119 = vector.broadcast %cst_55 : f32 to vector<8x128xf32>
    %120 = arith.mulf %119, %102 : vector<8x128xf32>
    %121 = arith.addf %118, %120 : vector<8x128xf32>
    %c127_i32_56 = arith.constant 127 : i32
    %122 = vector.broadcast %c127_i32_56 : i32 to vector<8x128xi32>
    %123 = arith.cmpi eq, %1, %122 : vector<8x128xi32>
    %c127_i32_57 = arith.constant 127 : i32
    %124 = tpu.dynamic_rotate %102 by %c127_i32_57 dim 1 : vector<8x128xf32>, i32 -> vector<8x128xf32>
    %cst_58 = arith.constant 0.000000e+00 : f32
    %125 = vector.broadcast %cst_58 : f32 to vector<8x128xf32>
    %126 = arith.select %123, %125, %124 : vector<8x128xi1>, vector<8x128xf32>
    %127 = arith.addf %121, %126 : vector<8x128xf32>
    %128 = math.absf %113 : vector<8x128xf32>
    %129 = math.absf %127 : vector<8x128xf32>
    %130 = arith.addf %128, %129 : vector<8x128xf32>
    %c0_59 = arith.constant 0 : index
    %c0_60 = arith.constant 0 : index
    %c0_61 = arith.constant 0 : index
    %131 = vector.load %arg8[%c0_59, %c0_60, %c0_61] : memref<1x8x128xf32, #tpu.memory_space<vmem>>, vector<1x8x128xf32>
    %132 = vector.shape_cast %131 : vector<1x8x128xf32> to vector<8x128xf32>
    %133 = vector.broadcast %4 : i32 to vector<8x128xi32>
    %134 = arith.cmpi slt, %0, %133 : vector<8x128xi32>
    %cst_62 = arith.constant 0.000000e+00 : f32
    %135 = vector.broadcast %cst_62 : f32 to vector<8x128xf32>
    %136 = arith.select %134, %132, %135 : vector<8x128xi1>, vector<8x128xf32>
    %c0_63 = arith.constant 0 : index
    %c0_64 = arith.constant 0 : index
    %c0_65 = arith.constant 0 : index
    %137 = vector.load %arg9[%c0_63, %c0_64, %c0_65] : memref<1x8x128xf32, #tpu.memory_space<vmem>>, vector<1x8x128xf32>
    %138 = vector.shape_cast %137 : vector<1x8x128xf32> to vector<8x128xf32>
    %139 = vector.extract_strided_slice %138 {offsets = [7, 0], sizes = [1, 128], strides = [1, 1]} : vector<8x128xf32> to vector<1x128xf32>
    %cst_66 = arith.constant 0.000000e+00 : f32
    %140 = vector.broadcast %cst_66 : f32 to vector<1x128xf32>
    %141 = arith.select %5, %139, %140 : vector<1x128xf32>
    %c0_67 = arith.constant 0 : index
    %c0_68 = arith.constant 0 : index
    %c0_69 = arith.constant 0 : index
    %142 = vector.load %arg10[%c0_67, %c0_68, %c0_69] : memref<1x8x128xf32, #tpu.memory_space<vmem>>, vector<1x8x128xf32>
    %143 = vector.shape_cast %142 : vector<1x8x128xf32> to vector<8x128xf32>
    %144 = vector.extract_strided_slice %143 {offsets = [0, 0], sizes = [1, 128], strides = [1, 1]} : vector<8x128xf32> to vector<1x128xf32>
    %cst_70 = arith.constant 0.000000e+00 : f32
    %145 = vector.broadcast %cst_70 : f32 to vector<1x128xf32>
    %146 = arith.select %8, %144, %145 : vector<1x128xf32>
    %c0_i32_71 = arith.constant 0 : i32
    %147 = vector.broadcast %c0_i32_71 : i32 to vector<8x128xi32>
    %148 = arith.cmpi eq, %0, %147 : vector<8x128xi32>
    %c1_i32_72 = arith.constant 1 : i32
    %149 = tpu.dynamic_rotate %136 by %c1_i32_72 dim 0 : vector<8x128xf32>, i32 -> vector<8x128xf32>
    %150 = vector.shape_cast %141 : vector<1x128xf32> to vector<1x128xf32>
    %151 = vector.broadcast %150 : vector<1x128xf32> to vector<8x128xf32>
    %152 = arith.select %148, %151, %149 : vector<8x128xi1>, vector<8x128xf32>
    %c7_i32_73 = arith.constant 7 : i32
    %153 = vector.broadcast %c7_i32_73 : i32 to vector<8x128xi32>
    %154 = arith.cmpi eq, %0, %153 : vector<8x128xi32>
    %c7_i32_74 = arith.constant 7 : i32
    %155 = tpu.dynamic_rotate %136 by %c7_i32_74 dim 0 : vector<8x128xf32>, i32 -> vector<8x128xf32>
    %156 = vector.shape_cast %146 : vector<1x128xf32> to vector<1x128xf32>
    %157 = vector.broadcast %156 : vector<1x128xf32> to vector<8x128xf32>
    %158 = arith.select %154, %157, %155 : vector<8x128xi1>, vector<8x128xf32>
    %cst_75 = arith.constant 2.000000e+00 : f32
    %159 = vector.broadcast %cst_75 : f32 to vector<8x128xf32>
    %160 = arith.mulf %159, %136 : vector<8x128xf32>
    %161 = arith.addf %152, %160 : vector<8x128xf32>
    %162 = arith.addf %161, %158 : vector<8x128xf32>
    %163 = arith.subf %152, %158 : vector<8x128xf32>
    %c127_i32_76 = arith.constant 127 : i32
    %164 = vector.broadcast %c127_i32_76 : i32 to vector<8x128xi32>
    %165 = arith.cmpi eq, %1, %164 : vector<8x128xi32>
    %c127_i32_77 = arith.constant 127 : i32
    %166 = tpu.dynamic_rotate %162 by %c127_i32_77 dim 1 : vector<8x128xf32>, i32 -> vector<8x128xf32>
    %cst_78 = arith.constant 0.000000e+00 : f32
    %167 = vector.broadcast %cst_78 : f32 to vector<8x128xf32>
    %168 = arith.select %165, %167, %166 : vector<8x128xi1>, vector<8x128xf32>
    %c0_i32_79 = arith.constant 0 : i32
    %169 = vector.broadcast %c0_i32_79 : i32 to vector<8x128xi32>
    %170 = arith.cmpi eq, %1, %169 : vector<8x128xi32>
    %c1_i32_80 = arith.constant 1 : i32
    %171 = tpu.dynamic_rotate %162 by %c1_i32_80 dim 1 : vector<8x128xf32>, i32 -> vector<8x128xf32>
    %cst_81 = arith.constant 0.000000e+00 : f32
    %172 = vector.broadcast %cst_81 : f32 to vector<8x128xf32>
    %173 = arith.select %170, %172, %171 : vector<8x128xi1>, vector<8x128xf32>
    %174 = arith.subf %168, %173 : vector<8x128xf32>
    %c0_i32_82 = arith.constant 0 : i32
    %175 = vector.broadcast %c0_i32_82 : i32 to vector<8x128xi32>
    %176 = arith.cmpi eq, %1, %175 : vector<8x128xi32>
    %c1_i32_83 = arith.constant 1 : i32
    %177 = tpu.dynamic_rotate %163 by %c1_i32_83 dim 1 : vector<8x128xf32>, i32 -> vector<8x128xf32>
    %cst_84 = arith.constant 0.000000e+00 : f32
    %178 = vector.broadcast %cst_84 : f32 to vector<8x128xf32>
    %179 = arith.select %176, %178, %177 : vector<8x128xi1>, vector<8x128xf32>
    %cst_85 = arith.constant 2.000000e+00 : f32
    %180 = vector.broadcast %cst_85 : f32 to vector<8x128xf32>
    %181 = arith.mulf %180, %163 : vector<8x128xf32>
    %182 = arith.addf %179, %181 : vector<8x128xf32>
    %c127_i32_86 = arith.constant 127 : i32
    %183 = vector.broadcast %c127_i32_86 : i32 to vector<8x128xi32>
    %184 = arith.cmpi eq, %1, %183 : vector<8x128xi32>
    %c127_i32_87 = arith.constant 127 : i32
    %185 = tpu.dynamic_rotate %163 by %c127_i32_87 dim 1 : vector<8x128xf32>, i32 -> vector<8x128xf32>
    %cst_88 = arith.constant 0.000000e+00 : f32
    %186 = vector.broadcast %cst_88 : f32 to vector<8x128xf32>
    %187 = arith.select %184, %186, %185 : vector<8x128xi1>, vector<8x128xf32>
    %188 = arith.addf %182, %187 : vector<8x128xf32>
    %189 = math.absf %174 : vector<8x128xf32>
    %190 = math.absf %188 : vector<8x128xf32>
    %191 = arith.addf %189, %190 : vector<8x128xf32>
    %192 = arith.maximumf %69, %130 : vector<8x128xf32>
    %193 = arith.subf %191, %192 : vector<8x128xf32>
    %194 = math.absf %193 : vector<8x128xf32>
    %195 = vector.broadcast %4 : i32 to vector<8x128xi32>
    %196 = arith.cmpi slt, %0, %195 : vector<8x128xi32>
    %c16_i32_89 = arith.constant 16 : i32
    %197 = vector.broadcast %c16_i32_89 : i32 to vector<8x128xi32>
    %198 = arith.cmpi slt, %1, %197 : vector<8x128xi32>
    %199 = arith.andi %196, %198 : vector<8x128xi1>
    %cst_90 = arith.constant 0.000000e+00 : f32
    %200 = vector.broadcast %cst_90 : f32 to vector<8x128xf32>
    %201 = arith.select %199, %194, %200 : vector<8x128xi1>, vector<8x128xf32>
    %202 = vector.shape_cast %201 : vector<8x128xf32> to vector<1x8x128xf32>
    %cst_91 = arith.constant dense<0.000000e+00> : vector<1xf32>
    %203 = vector.multi_reduction <add>, %202, %cst_91 [1, 2] : vector<1x8x128xf32> to vector<1xf32>
    %204 = vector.shape_cast %203 : vector<1xf32> to vector<1x1x1xf32>
    %205 = vector.extract %204[0, 0, 0] : f32 from vector<1x1x1xf32>
    %cst_92 = arith.constant 0.000000e+00 : f32
    %206 = vector.broadcast %cst_92 : f32 to vector<1x1x8x128xf32>
    %207 = vector.broadcast %205 : f32 to vector<1x1x8x128xf32>
    %208 = arith.addf %206, %207 : vector<1x1x8x128xf32>
    %c0_93 = arith.constant 0 : index
    %c0_94 = arith.constant 0 : index
    %c0_95 = arith.constant 0 : index
    %c0_96 = arith.constant 0 : index
    %209 = vector.load %arg11[%c0_93, %c0_94, %c0_95, %c0_96] : memref<1x1x8x128xf32, #tpu.memory_space<vmem>>, vector<1x1x8x128xf32>
    tpu.vector_store %arg11[%c0_93, %c0_94, %c0_95, %c0_96], %208 {strides = array<i32>} : memref<1x1x8x128xf32, #tpu.memory_space<vmem>>, vector<1x1x8x128xf32>,
    return
  }
  func.func @transform_0(%arg0: i32, %arg1: i32) -> (i32, i32, i32) {
    %c0_i32 = arith.constant 0 : i32
    %c0_i32_0 = arith.constant 0 : i32
    return %arg0, %arg1, %c0_i32 : i32, i32, i32
  }
  func.func @transform_1(%arg0: i32, %arg1: i32) -> (i32, i32, i32) {
    %c1_i32 = arith.constant 1 : i32
    %0 = arith.muli %arg1, %c1_i32 : i32
    %c1_i32_0 = arith.constant 1 : i32
    %1 = arith.subi %0, %c1_i32_0 : i32
    %c0_i32 = arith.constant 0 : i32
    %2 = arith.maxsi %1, %c0_i32 : i32
    %c0_i32_1 = arith.constant 0 : i32
    %c0_i32_2 = arith.constant 0 : i32
    return %arg0, %2, %c0_i32_1 : i32, i32, i32
  }
  func.func @transform_2(%arg0: i32, %arg1: i32) -> (i32, i32, i32) {
    %c1_i32 = arith.constant 1 : i32
    %0 = arith.addi %arg1, %c1_i32 : i32
    %c2_i32 = arith.constant 2 : i32
    %1 = arith.cmpi slt, %0, %c2_i32 : i32
    %c1_i32_0 = arith.constant 1 : i32
    %2 = arith.addi %arg1, %c1_i32_0 : i32
    %c1_i32_1 = arith.constant 1 : i32
    %3 = arith.muli %2, %c1_i32_1 : i32
    %c0_i32 = arith.constant 0 : i32
    %4 = arith.select %1, %3, %c0_i32 : i32
    %c0_i32_2 = arith.constant 0 : i32
    %c0_i32_3 = arith.constant 0 : i32
    return %arg0, %4, %c0_i32_2 : i32, i32, i32
  }
  func.func @transform_3(%arg0: i32, %arg1: i32) -> (i32, i32, i32) {
    %c0_i32 = arith.constant 0 : i32
    %c0_i32_0 = arith.constant 0 : i32
    return %arg0, %arg1, %c0_i32 : i32, i32, i32
  }
  func.func @transform_4(%arg0: i32, %arg1: i32) -> (i32, i32, i32) {
    %c1_i32 = arith.constant 1 : i32
    %0 = arith.muli %arg1, %c1_i32 : i32
    %c1_i32_0 = arith.constant 1 : i32
    %1 = arith.subi %0, %c1_i32_0 : i32
    %c0_i32 = arith.constant 0 : i32
    %2 = arith.maxsi %1, %c0_i32 : i32
    %c0_i32_1 = arith.constant 0 : i32
    %c0_i32_2 = arith.constant 0 : i32
    return %arg0, %2, %c0_i32_1 : i32, i32, i32
  }
  func.func @transform_5(%arg0: i32, %arg1: i32) -> (i32, i32, i32) {
    %c1_i32 = arith.constant 1 : i32
    %0 = arith.addi %arg1, %c1_i32 : i32
    %c2_i32 = arith.constant 2 : i32
    %1 = arith.cmpi slt, %0, %c2_i32 : i32
    %c1_i32_0 = arith.constant 1 : i32
    %2 = arith.addi %arg1, %c1_i32_0 : i32
    %c1_i32_1 = arith.constant 1 : i32
    %3 = arith.muli %2, %c1_i32_1 : i32
    %c0_i32 = arith.constant 0 : i32
    %4 = arith.select %1, %3, %c0_i32 : i32
    %c0_i32_2 = arith.constant 0 : i32
    %c0_i32_3 = arith.constant 0 : i32
    return %arg0, %4, %c0_i32_2 : i32, i32, i32
  }
  func.func @transform_6(%arg0: i32, %arg1: i32) -> (i32, i32, i32) {
    %c0_i32 = arith.constant 0 : i32
    %c0_i32_0 = arith.constant 0 : i32
    return %arg0, %arg1, %c0_i32 : i32, i32, i32
  }
  func.func @transform_7(%arg0: i32, %arg1: i32) -> (i32, i32, i32) {
    %c1_i32 = arith.constant 1 : i32
    %0 = arith.muli %arg1, %c1_i32 : i32
    %c1_i32_0 = arith.constant 1 : i32
    %1 = arith.subi %0, %c1_i32_0 : i32
    %c0_i32 = arith.constant 0 : i32
    %2 = arith.maxsi %1, %c0_i32 : i32
    %c0_i32_1 = arith.constant 0 : i32
    %c0_i32_2 = arith.constant 0 : i32
    return %arg0, %2, %c0_i32_1 : i32, i32, i32
  }
  func.func @transform_8(%arg0: i32, %arg1: i32) -> (i32, i32, i32) {
    %c1_i32 = arith.constant 1 : i32
    %0 = arith.addi %arg1, %c1_i32 : i32
    %c2_i32 = arith.constant 2 : i32
    %1 = arith.cmpi slt, %0, %c2_i32 : i32
    %c1_i32_0 = arith.constant 1 : i32
    %2 = arith.addi %arg1, %c1_i32_0 : i32
    %c1_i32_1 = arith.constant 1 : i32
    %3 = arith.muli %2, %c1_i32_1 : i32
    %c0_i32 = arith.constant 0 : i32
    %4 = arith.select %1, %3, %c0_i32 : i32
    %c0_i32_2 = arith.constant 0 : i32
    %c0_i32_3 = arith.constant 0 : i32
    return %arg0, %4, %c0_i32_2 : i32, i32, i32
  }
  func.func @transform_9(%arg0: i32, %arg1: i32) -> (i32, i32, i32, i32) {
    %c0_i32 = arith.constant 0 : i32
    %c0_i32_0 = arith.constant 0 : i32
    %c0_i32_1 = arith.constant 0 : i32
    return %arg0, %arg1, %c0_i32, %c0_i32_0 : i32, i32, i32, i32
  }
}

</mosaic_0001>

<llo_original>
// kernel: tpu_custom_call.1
$region0: #{tpu_custom_call.1}
  #allocation0 [shape = 'u32[]', space=smem, size = 0x4, offset = 0x4, fixed_abs, tag = 'smem constant byte address 0x4 - core index']
  #allocation1 [shape = 'u32[144,128]{1,0:T(1,128)}', space=vmem, size = 0x12000, scoped, tag = 'internal scratch']
  %s0 = inlined_call_operand.hbm [shape: f32[2,16,128], index: 0, kind: input, shape index: {}]
  %s1 = inlined_call_operand.hbm [shape: f32[2,16,128], index: 1, kind: input, shape index: {}]
  %s2 = inlined_call_operand.hbm [shape: f32[2,16,128], index: 2, kind: input, shape index: {}]
  %s3 = inlined_call_operand.hbm [shape: f32[2,16,128], index: 3, kind: input, shape index: {}]
  %s4 = inlined_call_operand.hbm [shape: f32[2,16,128], index: 4, kind: input, shape index: {}]
  %s5 = inlined_call_operand.hbm [shape: f32[2,16,128], index: 5, kind: input, shape index: {}]
  %s6 = inlined_call_operand.hbm [shape: f32[2,16,128], index: 6, kind: input, shape index: {}]
  %s7 = inlined_call_operand.hbm [shape: f32[2,16,128], index: 7, kind: input, shape index: {}]
  %s8 = inlined_call_operand.hbm [shape: f32[2,16,128], index: 8, kind: input, shape index: {}]
  %s9 = inlined_call_operand.hbm [shape: f32[2,2,8,128], index: 9, kind: output, shape index: {}]
  %s10 = sld [smem:[#allocation0]]
  $region105: #{tpu_custom_call.1} parent=0
    _
  %s12 = ssub.s32 1, %s10
  %s13 = scalar_select 0, %s12, %s10
  $region1: #{tpu_custom_call.1} parent=0
    #allocation2 [shape = 'u8[8192]{0}', space=vmem, size = 0x2000, scoped, tag = 'input window, operand 0']
    #allocation3 [shape = 's32[2]{0}', space=sflag, size = 0x8, scoped, tag = 'scoped memory for tpu_custom_call.1']
    #allocation4 [shape = 's32[2]{0}', space=sflag, size = 0x8, scoped, tag = 'scoped memory for tpu_custom_call.1']
    #allocation5 [shape = 'u8[8192]{0}', space=vmem, size = 0x2000, scoped, tag = 'input window, operand 1']
    #allocation6 [shape = 's32[2]{0}', space=sflag, size = 0x8, scoped, tag = 'scoped memory for tpu_custom_call.1']
    #allocation7 [shape = 'u8[8192]{0}', space=vmem, size = 0x2000, scoped, tag = 'input window, operand 2']
    #allocation8 [shape = 'u8[8192]{0}', space=vmem, size = 0x2000, scoped, tag = 'input window, operand 3']
    #allocation9 [shape = 's32[2]{0}', space=sflag, size = 0x8, scoped, tag = 'scoped memory for tpu_custom_call.1']
    #allocation10 [shape = 'u8[8192]{0}', space=vmem, size = 0x2000, scoped, tag = 'input window, operand 4']
    #allocation11 [shape = 'u8[8192]{0}', space=vmem, size = 0x2000, scoped, tag = 'input window, operand 5']
    #allocation12 [shape = 's32[2]{0}', space=sflag, size = 0x8, scoped, tag = 'scoped memory for tpu_custom_call.1']
    #allocation13 [shape = 'u8[8192]{0}', space=vmem, size = 0x2000, scoped, tag = 'input window, operand 6']
    #allocation14 [shape = 'u8[8192]{0}', space=vmem, size = 0x2000, scoped, tag = 'input window, operand 7']
    #allocation15 [shape = 's32[2]{0}', space=sflag, size = 0x8, scoped, tag = 'scoped memory for tpu_custom_call.1']
    #allocation16 [shape = 'u8[8192]{0}', space=vmem, size = 0x2000, scoped, tag = 'input window, operand 8']
    #allocation17 [shape = 'u8[8192]{0}', space=vmem, size = 0x2000, scoped, tag = 'output window, operand 0']
    %14 = vsyncpa [#allocation3], 0
    %s15 = scalar_lea.sflag [#allocation3], 1
    %16 = vsyncpa %s15, 0
    %17 = vsyncpa [#allocation6], 0
    %s18 = scalar_lea.sflag [#allocation6], 1
    %19 = vsyncpa %s18, 0
    %20 = vsyncpa [#allocation9], 0
    %s21 = scalar_lea.sflag [#allocation9], 1
    %22 = vsyncpa %s21, 0
    %23 = vsyncpa [#allocation12], 0
    %s24 = scalar_lea.sflag [#allocation12], 1
    %25 = vsyncpa %s24, 0
    %26 = vsyncpa [#allocation15], 0
    %s27 = scalar_lea.sflag [#allocation15], 1
    %28 = vsyncpa %s27, 0
    %29 = vsyncpa [#allocation4], 0
    %s30 = scalar_lea.sflag [#allocation4], 1
    %31 = vsyncpa %s30, 0
    loop: start=0, step=1, limit=6
    $region2: #{tpu_custom_call.1} parent=1 // loop_pre_header
      _
    $region3: #{tpu_custom_call.1} parent=1 // loop_header
      %s33 = sphi 0, %s37
      %p34 = scmp.ge.s32.totalorder %s33, 6
      %s40 = sphi 0, %s52
      %s41 = sphi 0, %s48
      %s42 = sphi 0, %s40
      %s43 = sphi 0, %s41
      %s44 = sphi 0, %s42
      %s45 = sphi 0, %s43
      %s57 = sphi 0, %s59
      %s60 = sphi 0, %s57
      %s61 = sphi 0, %s60
      %s77 = sphi 0, %s61
      %s91 = sphi 0, %s93
      %s94 = sphi 0, %s91
      %s95 = sphi 0, %s94
      %s111 = sphi 0, %s95
      %s125 = sphi 0, %s127
      %s128 = sphi 0, %s125
      %s129 = sphi 0, %s128
      %s145 = sphi 0, %s129
      %s153 = sphi 0, %s155
      %s156 = sphi 0, %s153
      %s157 = sphi 0, %s156
      %s173 = sphi 0, %s157
      %s187 = sphi 0, %s189
      %s190 = sphi 0, %s187
      %s191 = sphi 0, %s190
      %s207 = sphi 0, %s191
      %s221 = sphi 0, %s223
      %s224 = sphi 0, %s221
      %s225 = sphi 0, %s224
      %s241 = sphi 0, %s225
      %s249 = sphi 0, %s251
      %s252 = sphi 0, %s249
      %s253 = sphi 0, %s252
      %s269 = sphi 0, %s253
      %s283 = sphi 0, %s285
      %s286 = sphi 0, %s283
      %s287 = sphi 0, %s286
      %s303 = sphi 0, %s287
      %s317 = sphi 0, %s319
      %s320 = sphi 0, %s317
      %s321 = sphi 0, %s320
      %s337 = sphi 0, %s321
      %s345 = sphi 0, %s347
      %s348 = sphi 0, %s345
      %s349 = sphi 0, %s348
      %s365 = sphi 0, %s349
    $region4: #{tpu_custom_call.1} parent=1 // loop_header_branch
      %36 = sbr.rel (%p34) target = $region8
    $region5: #{tpu_custom_call.1} parent=1 // loop_body
      %s38 = ssub.s32 %s33, 1
      %s39 = ssub.s32 %s33, 2
      %s46 = sadd.s32 1, %s41
      %p47 = scmp.ge.s32.totalorder %s46, 2
      %s48 = scalar_select %p47, 0, %s46
      %s49 = sadd.s32 1, %s40
      %s50 = scalar_select %p47, %s49, %s40
      %p51 = scmp.ge.s32.totalorder %s50, 2
      %s52 = scalar_select %p51, 0, %s50
      %s53 = ssub.s32 %s40, %s52
      %s54 = ssub.s32 %s41, %s48
      %s55 = sor.u32 %s53, %s54
      %p56 = scmp.eq.s32.totalorder %s55, 0
      %s58 = sadd.s32 %s57, 1
      %s59 = scalar_select %p56, %s57, %s58
      %p62 = pneg %p56
      %p63 = scmp.eq.s32.totalorder %s33, 3
      %p64 = por %p62, %p63
      %p65 = scmp.ne.s32.totalorder %s57, %s60
      %p66 = scmp.eq.s32.totalorder %s33, 0
      %p67 = por %p65, %p66
      %p68 = scmp.ne.s32.totalorder %s57, %s60
      %p69 = scmp.eq.s32.totalorder %s38, 3
      %p70 = por %p68, %p69
      %p71 = scmp.ne.s32.totalorder %s60, %s61
      %p72 = scmp.eq.s32.totalorder %s38, 0
      %p73 = por %p71, %p72
      %p74 = scmp.ne.s32.totalorder %s60, %s61
      %p75 = scmp.eq.s32.totalorder %s39, 3
      %p76 = por %p74, %p75
      %p78 = scmp.ne.s32.totalorder %s61, %s77
      %p79 = scmp.eq.s32.totalorder %s39, 0
      %p80 = por %p78, %p79
      %s81 = ssub.s32 %s41, 1
      %p82 = scmp.gt.s32.totalorder %s81, 0
      %s83 = scalar_select %p82, %s81, 0
      %s84 = ssub.s32 %s48, 1
      %p85 = scmp.gt.s32.totalorder %s84, 0
      %s86 = scalar_select %p85, %s84, 0
      %s87 = ssub.s32 %s40, %s52
      %s88 = ssub.s32 %s83, %s86
      %s89 = sor.u32 %s87, %s88
      %p90 = scmp.eq.s32.totalorder %s89, 0
      %s92 = sadd.s32 %s91, 1
      %s93 = scalar_select %p90, %s91, %s92
      %p96 = pneg %p90
      %p97 = scmp.eq.s32.totalorder %s33, 3
      %p98 = por %p96, %p97
      %p99 = scmp.ne.s32.totalorder %s91, %s94
      %p100 = scmp.eq.s32.totalorder %s33, 0
      %p101 = por %p99, %p100
      %p102 = scmp.ne.s32.totalorder %s91, %s94
      %p103 = scmp.eq.s32.totalorder %s38, 3
      %p104 = por %p102, %p103
      %p105 = scmp.ne.s32.totalorder %s94, %s95
      %p106 = scmp.eq.s32.totalorder %s38, 0
      %p107 = por %p105, %p106
      %p108 = scmp.ne.s32.totalorder %s94, %s95
      %p109 = scmp.eq.s32.totalorder %s39, 3
      %p110 = por %p108, %p109
      %p112 = scmp.ne.s32.totalorder %s95, %s111
      %p113 = scmp.eq.s32.totalorder %s39, 0
      %p114 = por %p112, %p113
      %s115 = sadd.s32 %s41, 1
      %p116 = scmp.lt.s32.totalorder %s115, 2
      %s117 = scalar_select %p116, %s115, 0
      %s118 = sadd.s32 %s48, 1
      %p119 = scmp.lt.s32.totalorder %s118, 2
      %s120 = scalar_select %p119, %s118, 0
      %s121 = ssub.s32 %s40, %s52
      %s122 = ssub.s32 %s117, %s120
      %s123 = sor.u32 %s121, %s122
      %p124 = scmp.eq.s32.totalorder %s123, 0
      %s126 = sadd.s32 %s125, 1
      %s127 = scalar_select %p124, %s125, %s126
      %p130 = pneg %p124
      %p131 = scmp.eq.s32.totalorder %s33, 3
      %p132 = por %p130, %p131
      %p133 = scmp.ne.s32.totalorder %s125, %s128
      %p134 = scmp.eq.s32.totalorder %s33, 0
      %p135 = por %p133, %p134
      %p136 = scmp.ne.s32.totalorder %s125, %s128
      %p137 = scmp.eq.s32.totalorder %s38, 3
      %p138 = por %p136, %p137
      %p139 = scmp.ne.s32.totalorder %s128, %s129
      %p140 = scmp.eq.s32.totalorder %s38, 0
      %p141 = por %p139, %p140
      %p142 = scmp.ne.s32.totalorder %s128, %s129
      %p143 = scmp.eq.s32.totalorder %s39, 3
      %p144 = por %p142, %p143
      %p146 = scmp.ne.s32.totalorder %s129, %s145
      %p147 = scmp.eq.s32.totalorder %s39, 0
      %p148 = por %p146, %p147
      %s149 = ssub.s32 %s40, %s52
      %s150 = ssub.s32 %s41, %s48
      %s151 = sor.u32 %s149, %s150
      %p152 = scmp.eq.s32.totalorder %s151, 0
      %s154 = sadd.s32 %s153, 1
      %s155 = scalar_select %p152, %s153, %s154
      %p158 = pneg %p152
      %p159 = scmp.eq.s32.totalorder %s33, 3
      %p160 = por %p158, %p159
      %p161 = scmp.ne.s32.totalorder %s153, %s156
      %p162 = scmp.eq.s32.totalorder %s33, 0
      %p163 = por %p161, %p162
      %p164 = scmp.ne.s32.totalorder %s153, %s156
      %p165 = scmp.eq.s32.totalorder %s38, 3
      %p166 = por %p164, %p165
      %p167 = scmp.ne.s32.totalorder %s156, %s157
      %p168 = scmp.eq.s32.totalorder %s38, 0
      %p169 = por %p167, %p168
      %p170 = scmp.ne.s32.totalorder %s156, %s157
      %p171 = scmp.eq.s32.totalorder %s39, 3
      %p172 = por %p170, %p171
      %p174 = scmp.ne.s32.totalorder %s157, %s173
      %p175 = scmp.eq.s32.totalorder %s39, 0
      %p176 = por %p174, %p175
      %s177 = ssub.s32 %s41, 1
      %p178 = scmp.gt.s32.totalorder %s177, 0
      %s179 = scalar_select %p178, %s177, 0
      %s180 = ssub.s32 %s48, 1
      %p181 = scmp.gt.s32.totalorder %s180, 0
      %s182 = scalar_select %p181, %s180, 0
      %s183 = ssub.s32 %s40, %s52
      %s184 = ssub.s32 %s179, %s182
      %s185 = sor.u32 %s183, %s184
      %p186 = scmp.eq.s32.totalorder %s185, 0
      %s188 = sadd.s32 %s187, 1
      %s189 = scalar_select %p186, %s187, %s188
      %p192 = pneg %p186
      %p193 = scmp.eq.s32.totalorder %s33, 3
      %p194 = por %p192, %p193
      %p195 = scmp.ne.s32.totalorder %s187, %s190
      %p196 = scmp.eq.s32.totalorder %s33, 0
      %p197 = por %p195, %p196
      %p198 = scmp.ne.s32.totalorder %s187, %s190
      %p199 = scmp.eq.s32.totalorder %s38, 3
      %p200 = por %p198, %p199
      %p201 = scmp.ne.s32.totalorder %s190, %s191
      %p202 = scmp.eq.s32.totalorder %s38, 0
      %p203 = por %p201, %p202
      %p204 = scmp.ne.s32.totalorder %s190, %s191
      %p205 = scmp.eq.s32.totalorder %s39, 3
      %p206 = por %p204, %p205
      %p208 = scmp.ne.s32.totalorder %s191, %s207
      %p209 = scmp.eq.s32.totalorder %s39, 0
      %p210 = por %p208, %p209
      %s211 = sadd.s32 %s41, 1
      %p212 = scmp.lt.s32.totalorder %s211, 2
      %s213 = scalar_select %p212, %s211, 0
      %s214 = sadd.s32 %s48, 1
      %p215 = scmp.lt.s32.totalorder %s214, 2
      %s216 = scalar_select %p215, %s214, 0
      %s217 = ssub.s32 %s40, %s52
      %s218 = ssub.s32 %s213, %s216
      %s219 = sor.u32 %s217, %s218
      %p220 = scmp.eq.s32.totalorder %s219, 0
      %s222 = sadd.s32 %s221, 1
      %s223 = scalar_select %p220, %s221, %s222
      %p226 = pneg %p220
      %p227 = scmp.eq.s32.totalorder %s33, 3
      %p228 = por %p226, %p227
      %p229 = scmp.ne.s32.totalorder %s221, %s224
      %p230 = scmp.eq.s32.totalorder %s33, 0
      %p231 = por %p229, %p230
      %p232 = scmp.ne.s32.totalorder %s221, %s224
      %p233 = scmp.eq.s32.totalorder %s38, 3
      %p234 = por %p232, %p233
      %p235 = scmp.ne.s32.totalorder %s224, %s225
      %p236 = scmp.eq.s32.totalorder %s38, 0
      %p237 = por %p235, %p236
      %p238 = scmp.ne.s32.totalorder %s224, %s225
      %p239 = scmp.eq.s32.totalorder %s39, 3
      %p240 = por %p238, %p239
      %p242 = scmp.ne.s32.totalorder %s225, %s241
      %p243 = scmp.eq.s32.totalorder %s39, 0
      %p244 = por %p242, %p243
      %s245 = ssub.s32 %s40, %s52
      %s246 = ssub.s32 %s41, %s48
      %s247 = sor.u32 %s245, %s246
      %p248 = scmp.eq.s32.totalorder %s247, 0
      %s250 = sadd.s32 %s249, 1
      %s251 = scalar_select %p248, %s249, %s250
      %p254 = pneg %p248
      %p255 = scmp.eq.s32.totalorder %s33, 3
      %p256 = por %p254, %p255
      %p257 = scmp.ne.s32.totalorder %s249, %s252
      %p258 = scmp.eq.s32.totalorder %s33, 0
      %p259 = por %p257, %p258
      %p260 = scmp.ne.s32.totalorder %s249, %s252
      %p261 = scmp.eq.s32.totalorder %s38, 3
      %p262 = por %p260, %p261
      %p263 = scmp.ne.s32.totalorder %s252, %s253
      %p264 = scmp.eq.s32.totalorder %s38, 0
      %p265 = por %p263, %p264
      %p266 = scmp.ne.s32.totalorder %s252, %s253
      %p267 = scmp.eq.s32.totalorder %s39, 3
      %p268 = por %p266, %p267
      %p270 = scmp.ne.s32.totalorder %s253, %s269
      %p271 = scmp.eq.s32.totalorder %s39, 0
      %p272 = por %p270, %p271
      %s273 = ssub.s32 %s41, 1
      %p274 = scmp.gt.s32.totalorder %s273, 0
      %s275 = scalar_select %p274, %s273, 0
      %s276 = ssub.s32 %s48, 1
      %p277 = scmp.gt.s32.totalorder %s276, 0
      %s278 = scalar_select %p277, %s276, 0
      %s279 = ssub.s32 %s40, %s52
      %s280 = ssub.s32 %s275, %s278
      %s281 = sor.u32 %s279, %s280
      %p282 = scmp.eq.s32.totalorder %s281, 0
      %s284 = sadd.s32 %s283, 1
      %s285 = scalar_select %p282, %s283, %s284
      %p288 = pneg %p282
      %p289 = scmp.eq.s32.totalorder %s33, 3
      %p290 = por %p288, %p289
      %p291 = scmp.ne.s32.totalorder %s283, %s286
      %p292 = scmp.eq.s32.totalorder %s33, 0
      %p293 = por %p291, %p292
      %p294 = scmp.ne.s32.totalorder %s283, %s286
      %p295 = scmp.eq.s32.totalorder %s38, 3
      %p296 = por %p294, %p295
      %p297 = scmp.ne.s32.totalorder %s286, %s287
      %p298 = scmp.eq.s32.totalorder %s38, 0
      %p299 = por %p297, %p298
      %p300 = scmp.ne.s32.totalorder %s286, %s287
      %p301 = scmp.eq.s32.totalorder %s39, 3
      %p302 = por %p300, %p301
      %p304 = scmp.ne.s32.totalorder %s287, %s303
      %p305 = scmp.eq.s32.totalorder %s39, 0
      %p306 = por %p304, %p305
      %s307 = sadd.s32 %s41, 1
      %p308 = scmp.lt.s32.totalorder %s307, 2
      %s309 = scalar_select %p308, %s307, 0
      %s310 = sadd.s32 %s48, 1
      %p311 = scmp.lt.s32.totalorder %s310, 2
      %s312 = scalar_select %p311, %s310, 0
      %s313 = ssub.s32 %s40, %s52
      %s314 = ssub.s32 %s309, %s312
      %s315 = sor.u32 %s313, %s314
      %p316 = scmp.eq.s32.totalorder %s315, 0
      %s318 = sadd.s32 %s317, 1
      %s319 = scalar_select %p316, %s317, %s318
      %p322 = pneg %p316
      %p323 = scmp.eq.s32.totalorder %s33, 3
      %p324 = por %p322, %p323
      %p325 = scmp.ne.s32.totalorder %s317, %s320
      %p326 = scmp.eq.s32.totalorder %s33, 0
      %p327 = por %p325, %p326
      %p328 = scmp.ne.s32.totalorder %s317, %s320
      %p329 = scmp.eq.s32.totalorder %s38, 3
      %p330 = por %p328, %p329
      %p331 = scmp.ne.s32.totalorder %s320, %s321
      %p332 = scmp.eq.s32.totalorder %s38, 0
      %p333 = por %p331, %p332
      %p334 = scmp.ne.s32.totalorder %s320, %s321
      %p335 = scmp.eq.s32.totalorder %s39, 3
      %p336 = por %p334, %p335
      %p338 = scmp.ne.s32.totalorder %s321, %s337
      %p339 = scmp.eq.s32.totalorder %s39, 0
      %p340 = por %p338, %p339
      %s341 = ssub.s32 %s40, %s52
      %s342 = ssub.s32 %s41, %s48
      %s343 = sor.u32 %s341, %s342
      %p344 = scmp.eq.s32.totalorder %s343, 0
      %s346 = sadd.s32 %s345, 1
      %s347 = scalar_select %p344, %s345, %s346
      %p350 = pneg %p344
      %p351 = scmp.eq.s32.totalorder %s33, 3
      %p352 = por %p350, %p351
      %p353 = scmp.ne.s32.totalorder %s345, %s348
      %p354 = scmp.eq.s32.totalorder %s33, 0
      %p355 = por %p353, %p354
      %p356 = scmp.ne.s32.totalorder %s345, %s348
      %p357 = scmp.eq.s32.totalorder %s38, 3
      %p358 = por %p356, %p357
      %p359 = scmp.ne.s32.totalorder %s348, %s349
      %p360 = scmp.eq.s32.totalorder %s38, 0
      %p361 = por %p359, %p360
      %p362 = scmp.ne.s32.totalorder %s348, %s349
      %p363 = scmp.eq.s32.totalorder %s39, 3
      %p364 = por %p362, %p363
      %p366 = scmp.ne.s32.totalorder %s349, %s365
      %p367 = scmp.eq.s32.totalorder %s39, 0
      %p368 = por %p366, %p367
      %p369 = scmp.le.s32.totalorder 1, %s33
      %p370 = scmp.lt.s32.totalorder %s33, 5
      %p371 = pnand %p369, %p370
      %p372 = pneg %p371
      // Predicated region
      $region9: #{tpu_custom_call.1} parent=5 // pred_check
        _
      $region10: #{tpu_custom_call.1} parent=5 // pred_check_branch
        %374 = sbr.rel (%p371) target = $region12
      $region11: #{tpu_custom_call.1} parent=5 // pred_region
        %s375 = ssub.s32 %s33, 1
      $region12: #{tpu_custom_call.1} parent=5 // pred_fallthru
        _
      %p376 = scmp.lt.s32.totalorder %s33, 4
      // Predicated region
      $region13: #{tpu_custom_call.1} parent=5 // pred_check
        %p377 = pneg %p376
      $region14: #{tpu_custom_call.1} parent=5 // pred_check_branch
        %379 = sbr.rel (%p377) target = $region16
      $region15: #{tpu_custom_call.1} parent=5 // pred_region
        // Predicated region
        $region17: #{tpu_custom_call.1} parent=15 // pred_check
          %p380 = pneg %p67
        $region18: #{tpu_custom_call.1} parent=15 // pred_check_branch
          %382 = sbr.rel (%p380) target = $region20
        $region19: #{tpu_custom_call.1} parent=15 // pred_region
          %s383 = sand.u32 %s57, 1
          %s384 = scalar_lea.sflag [#allocation3], %s383
          %s385 = sand.u32 %s57, 1
          %s386 = smul.addr %s385, 8
          %s387 = scalar_lea.vmem [#allocation2], %s386
          %s389 = ssub.s32 128, 128
          %390 = vsyncadd %s384, %s389
          %s391 = smul.addr %s40, 2
          %s392 = sadd.s32 %s41, %s391
          %s393 = smul.addr %s392, 128
          %s394 = scalar_lea.hbm %s0, %s393
          %s396 = sshll.u32 %s387, 4
          %s397 = int_to_ptr.vmem [resolvable:$true] %s396
          %399 = dma.hbm_to_vmem [thread:$0]  %s394, 128, %s397, %s384
        $region20: #{tpu_custom_call.1} parent=15 // pred_fallthru
          _
        // Predicated region
        $region21: #{tpu_custom_call.1} parent=15 // pred_check
          %p400 = pneg %p101
        $region22: #{tpu_custom_call.1} parent=15 // pred_check_branch
          %402 = sbr.rel (%p400) target = $region24
        $region23: #{tpu_custom_call.1} parent=15 // pred_region
          %s403 = sand.u32 %s33, 1
          %s404 = scalar_lea.sflag [#allocation6], %s403
          %s405 = sand.u32 %s91, 1
          %s406 = smul.addr %s405, 8
          %s407 = scalar_lea.vmem [#allocation5], %s406
          %s408 = ssub.s32 %s41, 1
          %p409 = scmp.gt.s32.totalorder %s408, 0
          %s410 = scalar_select %p409, %s408, 0
          %s412 = ssub.s32 128, 128
          %413 = vsyncadd %s404, %s412
          %s414 = smul.addr %s40, 2
          %s415 = sadd.s32 %s410, %s414
          %s416 = smul.addr %s415, 128
          %s417 = scalar_lea.hbm %s1, %s416
          %s419 = sshll.u32 %s407, 4
          %s420 = int_to_ptr.vmem [resolvable:$true] %s419
          %422 = dma.hbm_to_vmem [thread:$0]  %s417, 128, %s420, %s404
        $region24: #{tpu_custom_call.1} parent=15 // pred_fallthru
          _
        // Predicated region
        $region25: #{tpu_custom_call.1} parent=15 // pred_check
          %p423 = pneg %p135
        $region26: #{tpu_custom_call.1} parent=15 // pred_check_branch
          %425 = sbr.rel (%p423) target = $region28
        $region27: #{tpu_custom_call.1} parent=15 // pred_region
          %s426 = sand.u32 %s33, 1
          %s427 = scalar_lea.sflag [#allocation6], %s426
          %s428 = sand.u32 %s125, 1
          %s429 = smul.addr %s428, 8
          %s430 = scalar_lea.vmem [#allocation7], %s429
          %s431 = sadd.s32 %s41, 1
          %p432 = scmp.lt.s32.totalorder %s431, 2
          %s433 = scalar_select %p432, %s431, 0
          %s435 = ssub.s32 128, 128
          %436 = vsyncadd %s427, %s435
          %s437 = smul.addr %s40, 2
          %s438 = sadd.s32 %s433, %s437
          %s439 = smul.addr %s438, 128
          %s440 = scalar_lea.hbm %s2, %s439
          %s442 = sshll.u32 %s430, 4
          %s443 = int_to_ptr.vmem [resolvable:$true] %s442
          %445 = dma.hbm_to_vmem [thread:$0]  %s440, 128, %s443, %s427
        $region28: #{tpu_custom_call.1} parent=15 // pred_fallthru
          _
        // Predicated region
        $region29: #{tpu_custom_call.1} parent=15 // pred_check
          %p446 = pneg %p163
        $region30: #{tpu_custom_call.1} parent=15 // pred_check_branch
          %448 = sbr.rel (%p446) target = $region32
        $region31: #{tpu_custom_call.1} parent=15 // pred_region
          %s449 = sand.u32 %s33, 1
          %s450 = scalar_lea.sflag [#allocation9], %s449
          %s451 = sand.u32 %s153, 1
          %s452 = smul.addr %s451, 8
          %s453 = scalar_lea.vmem [#allocation8], %s452
          %s455 = ssub.s32 128, 128
          %456 = vsyncadd %s450, %s455
          %s457 = smul.addr %s40, 2
          %s458 = sadd.s32 %s41, %s457
          %s459 = smul.addr %s458, 128
          %s460 = scalar_lea.hbm %s3, %s459
          %s462 = sshll.u32 %s453, 4
          %s463 = int_to_ptr.vmem [resolvable:$true] %s462
          %465 = dma.hbm_to_vmem [thread:$0]  %s460, 128, %s463, %s450
        $region32: #{tpu_custom_call.1} parent=15 // pred_fallthru
          _
        // Predicated region
        $region33: #{tpu_custom_call.1} parent=15 // pred_check
          %p466 = pneg %p197
        $region34: #{tpu_custom_call.1} parent=15 // pred_check_branch
          %468 = sbr.rel (%p466) target = $region36
        $region35: #{tpu_custom_call.1} parent=15 // pred_region
          %s469 = sand.u32 %s33, 1
          %s470 = scalar_lea.sflag [#allocation9], %s469
          %s471 = sand.u32 %s187, 1
          %s472 = smul.addr %s471, 8
          %s473 = scalar_lea.vmem [#allocation10], %s472
          %s474 = ssub.s32 %s41, 1
          %p475 = scmp.gt.s32.totalorder %s474, 0
          %s476 = scalar_select %p475, %s474, 0
          %s478 = ssub.s32 128, 128
          %479 = vsyncadd %s470, %s478
          %s480 = smul.addr %s40, 2
          %s481 = sadd.s32 %s476, %s480
          %s482 = smul.addr %s481, 128
          %s483 = scalar_lea.hbm %s4, %s482
          %s485 = sshll.u32 %s473, 4
          %s486 = int_to_ptr.vmem [resolvable:$true] %s485
          %488 = dma.hbm_to_vmem [thread:$0]  %s483, 128, %s486, %s470
        $region36: #{tpu_custom_call.1} parent=15 // pred_fallthru
          _
        // Predicated region
        $region37: #{tpu_custom_call.1} parent=15 // pred_check
          %p489 = pneg %p231
        $region38: #{tpu_custom_call.1} parent=15 // pred_check_branch
          %491 = sbr.rel (%p489) target = $region40
        $region39: #{tpu_custom_call.1} parent=15 // pred_region
          %s492 = sand.u32 %s33, 1
          %s493 = scalar_lea.sflag [#allocation12], %s492
          %s494 = sand.u32 %s221, 1
          %s495 = smul.addr %s494, 8
          %s496 = scalar_lea.vmem [#allocation11], %s495
          %s497 = sadd.s32 %s41, 1
          %p498 = scmp.lt.s32.totalorder %s497, 2
          %s499 = scalar_select %p498, %s497, 0
          %s501 = ssub.s32 128, 128
          %502 = vsyncadd %s493, %s501
          %s503 = smul.addr %s40, 2
          %s504 = sadd.s32 %s499, %s503
          %s505 = smul.addr %s504, 128
          %s506 = scalar_lea.hbm %s5, %s505
          %s508 = sshll.u32 %s496, 4
          %s509 = int_to_ptr.vmem [resolvable:$true] %s508
          %511 = dma.hbm_to_vmem [thread:$0]  %s506, 128, %s509, %s493
        $region40: #{tpu_custom_call.1} parent=15 // pred_fallthru
          _
        // Predicated region
        $region41: #{tpu_custom_call.1} parent=15 // pred_check
          %p512 = pneg %p259
        $region42: #{tpu_custom_call.1} parent=15 // pred_check_branch
          %514 = sbr.rel (%p512) target = $region44
        $region43: #{tpu_custom_call.1} parent=15 // pred_region
          %s515 = sand.u32 %s33, 1
          %s516 = scalar_lea.sflag [#allocation12], %s515
          %s517 = sand.u32 %s249, 1
          %s518 = smul.addr %s517, 8
          %s519 = scalar_lea.vmem [#allocation13], %s518
          %s521 = ssub.s32 128, 128
          %522 = vsyncadd %s516, %s521
          %s523 = smul.addr %s40, 2
          %s524 = sadd.s32 %s41, %s523
          %s525 = smul.addr %s524, 128
          %s526 = scalar_lea.hbm %s6, %s525
          %s528 = sshll.u32 %s519, 4
          %s529 = int_to_ptr.vmem [resolvable:$true] %s528
          %531 = dma.hbm_to_vmem [thread:$0]  %s526, 128, %s529, %s516
        $region44: #{tpu_custom_call.1} parent=15 // pred_fallthru
          _
        // Predicated region
        $region45: #{tpu_custom_call.1} parent=15 // pred_check
          %p532 = pneg %p293
        $region46: #{tpu_custom_call.1} parent=15 // pred_check_branch
          %534 = sbr.rel (%p532) target = $region48
        $region47: #{tpu_custom_call.1} parent=15 // pred_region
          %s535 = sand.u32 %s33, 1
          %s536 = scalar_lea.sflag [#allocation15], %s535
          %s537 = sand.u32 %s283, 1
          %s538 = smul.addr %s537, 8
          %s539 = scalar_lea.vmem [#allocation14], %s538
          %s540 = ssub.s32 %s41, 1
          %p541 = scmp.gt.s32.totalorder %s540, 0
          %s542 = scalar_select %p541, %s540, 0
          %s544 = ssub.s32 128, 128
          %545 = vsyncadd %s536, %s544
          %s546 = smul.addr %s40, 2
          %s547 = sadd.s32 %s542, %s546
          %s548 = smul.addr %s547, 128
          %s549 = scalar_lea.hbm %s7, %s548
          %s551 = sshll.u32 %s539, 4
          %s552 = int_to_ptr.vmem [resolvable:$true] %s551
          %554 = dma.hbm_to_vmem [thread:$0]  %s549, 128, %s552, %s536
        $region48: #{tpu_custom_call.1} parent=15 // pred_fallthru
          _
        // Predicated region
        $region49: #{tpu_custom_call.1} parent=15 // pred_check
          %p555 = pneg %p327
        $region50: #{tpu_custom_call.1} parent=15 // pred_check_branch
          %557 = sbr.rel (%p555) target = $region52
        $region51: #{tpu_custom_call.1} parent=15 // pred_region
          %s558 = sand.u32 %s33, 1
          %s559 = scalar_lea.sflag [#allocation15], %s558
          %s560 = sand.u32 %s317, 1
          %s561 = smul.addr %s560, 8
          %s562 = scalar_lea.vmem [#allocation16], %s561
          %s563 = sadd.s32 %s41, 1
          %p564 = scmp.lt.s32.totalorder %s563, 2
          %s565 = scalar_select %p564, %s563, 0
          %s567 = ssub.s32 128, 128
          %568 = vsyncadd %s559, %s567
          %s569 = smul.addr %s40, 2
          %s570 = sadd.s32 %s565, %s569
          %s571 = smul.addr %s570, 128
          %s572 = scalar_lea.hbm %s8, %s571
          %s574 = sshll.u32 %s562, 4
          %s575 = int_to_ptr.vmem [resolvable:$true] %s574
          %577 = dma.hbm_to_vmem [thread:$0]  %s572, 128, %s575, %s559
        $region52: #{tpu_custom_call.1} parent=15 // pred_fallthru
          _
      $region16: #{tpu_custom_call.1} parent=5 // pred_fallthru
        _
      %p578 = scmp.le.s32.totalorder 1, %s33
      %p579 = scmp.lt.s32.totalorder %s33, 5
      %p580 = pnand %p578, %p579
      %p581 = pneg %p580
      // Predicated region
      $region53: #{tpu_custom_call.1} parent=5 // pred_check
        _
      $region54: #{tpu_custom_call.1} parent=5 // pred_check_branch
        %583 = sbr.rel (%p580) target = $region56
      $region55: #{tpu_custom_call.1} parent=5 // pred_region
        %s584 = ssub.s32 %s33, 1
        %s585 = sand.u32 %s60, 1
        %s586 = scalar_lea.sflag [#allocation3], %s585
        %s587 = sand.u32 %s60, 1
        %s588 = smul.addr %s587, 8
        %s589 = scalar_lea.vmem [#allocation2], %s588
        // Predicated region
        $region57: #{tpu_custom_call.1} parent=55 // pred_check
          %p590 = pneg %p73
        $region58: #{tpu_custom_call.1} parent=55 // pred_check_branch
          %592 = sbr.rel (%p590) target = $region60
        $region59: #{tpu_custom_call.1} parent=55 // pred_region
          %593 = dma.done %s586, 128
        $region60: #{tpu_custom_call.1} parent=55 // pred_fallthru
          _
        %s594 = sand.u32 %s38, 1
        %s595 = scalar_lea.sflag [#allocation6], %s594
        %s596 = sand.u32 %s94, 1
        %s597 = smul.addr %s596, 8
        %s598 = scalar_lea.vmem [#allocation5], %s597
        // Predicated region
        $region61: #{tpu_custom_call.1} parent=55 // pred_check
          %p599 = pneg %p107
        $region62: #{tpu_custom_call.1} parent=55 // pred_check_branch
          %601 = sbr.rel (%p599) target = $region64
        $region63: #{tpu_custom_call.1} parent=55 // pred_region
          %602 = dma.done %s595, 128
        $region64: #{tpu_custom_call.1} parent=55 // pred_fallthru
          _
        %s603 = sand.u32 %s38, 1
        %s604 = scalar_lea.sflag [#allocation6], %s603
        %s605 = sand.u32 %s128, 1
        %s606 = smul.addr %s605, 8
        %s607 = scalar_lea.vmem [#allocation7], %s606
        // Predicated region
        $region65: #{tpu_custom_call.1} parent=55 // pred_check
          %p608 = pneg %p141
        $region66: #{tpu_custom_call.1} parent=55 // pred_check_branch
          %610 = sbr.rel (%p608) target = $region68
        $region67: #{tpu_custom_call.1} parent=55 // pred_region
          %611 = dma.done %s604, 128
        $region68: #{tpu_custom_call.1} parent=55 // pred_fallthru
          _
        %s612 = sand.u32 %s38, 1
        %s613 = scalar_lea.sflag [#allocation9], %s612
        %s614 = sand.u32 %s156, 1
        %s615 = smul.addr %s614, 8
        %s616 = scalar_lea.vmem [#allocation8], %s615
        // Predicated region
        $region69: #{tpu_custom_call.1} parent=55 // pred_check
          %p617 = pneg %p169
        $region70: #{tpu_custom_call.1} parent=55 // pred_check_branch
          %619 = sbr.rel (%p617) target = $region72
        $region71: #{tpu_custom_call.1} parent=55 // pred_region
          %620 = dma.done %s613, 128
        $region72: #{tpu_custom_call.1} parent=55 // pred_fallthru
          _
        %s621 = sand.u32 %s38, 1
        %s622 = scalar_lea.sflag [#allocation9], %s621
        %s623 = sand.u32 %s190, 1
        %s624 = smul.addr %s623, 8
        %s625 = scalar_lea.vmem [#allocation10], %s624
        // Predicated region
        $region73: #{tpu_custom_call.1} parent=55 // pred_check
          %p626 = pneg %p203
        $region74: #{tpu_custom_call.1} parent=55 // pred_check_branch
          %628 = sbr.rel (%p626) target = $region76
        $region75: #{tpu_custom_call.1} parent=55 // pred_region
          %629 = dma.done %s622, 128
        $region76: #{tpu_custom_call.1} parent=55 // pred_fallthru
          _
        %s630 = sand.u32 %s38, 1
        %s631 = scalar_lea.sflag [#allocation12], %s630
        %s632 = sand.u32 %s224, 1
        %s633 = smul.addr %s632, 8
        %s634 = scalar_lea.vmem [#allocation11], %s633
        // Predicated region
        $region77: #{tpu_custom_call.1} parent=55 // pred_check
          %p635 = pneg %p237
        $region78: #{tpu_custom_call.1} parent=55 // pred_check_branch
          %637 = sbr.rel (%p635) target = $region80
        $region79: #{tpu_custom_call.1} parent=55 // pred_region
          %638 = dma.done %s631, 128
        $region80: #{tpu_custom_call.1} parent=55 // pred_fallthru
          _
        %s639 = sand.u32 %s38, 1
        %s640 = scalar_lea.sflag [#allocation12], %s639
        %s641 = sand.u32 %s252, 1
        %s642 = smul.addr %s641, 8
        %s643 = scalar_lea.vmem [#allocation13], %s642
        // Predicated region
        $region81: #{tpu_custom_call.1} parent=55 // pred_check
          %p644 = pneg %p265
        $region82: #{tpu_custom_call.1} parent=55 // pred_check_branch
          %646 = sbr.rel (%p644) target = $region84
        $region83: #{tpu_custom_call.1} parent=55 // pred_region
          %647 = dma.done %s640, 128
        $region84: #{tpu_custom_call.1} parent=55 // pred_fallthru
          _
        %s648 = sand.u32 %s38, 1
        %s649 = scalar_lea.sflag [#allocation15], %s648
        %s650 = sand.u32 %s286, 1
        %s651 = smul.addr %s650, 8
        %s652 = scalar_lea.vmem [#allocation14], %s651
        // Predicated region
        $region85: #{tpu_custom_call.1} parent=55 // pred_check
          %p653 = pneg %p299
        $region86: #{tpu_custom_call.1} parent=55 // pred_check_branch
          %655 = sbr.rel (%p653) target = $region88
        $region87: #{tpu_custom_call.1} parent=55 // pred_region
          %656 = dma.done %s649, 128
        $region88: #{tpu_custom_call.1} parent=55 // pred_fallthru
          _
        %s657 = sand.u32 %s38, 1
        %s658 = scalar_lea.sflag [#allocation15], %s657
        %s659 = sand.u32 %s320, 1
        %s660 = smul.addr %s659, 8
        %s661 = scalar_lea.vmem [#allocation16], %s660
        // Predicated region
        $region89: #{tpu_custom_call.1} parent=55 // pred_check
          %p662 = pneg %p333
        $region90: #{tpu_custom_call.1} parent=55 // pred_check_branch
          %664 = sbr.rel (%p662) target = $region92
        $region91: #{tpu_custom_call.1} parent=55 // pred_region
          %665 = dma.done %s658, 128
        $region92: #{tpu_custom_call.1} parent=55 // pred_fallthru
          _
        %s666 = sand.u32 %s60, 1
        %s667 = scalar_lea.sflag [#allocation3], %s666
        %s668 = sand.u32 %s60, 1
        %s669 = smul.addr %s668, 8
        %s670 = scalar_lea.vmem [#allocation2], %s669
        %p671 = pneg %p73
        %p672 = pneg %p70
        %s673 = sand.u32 %s38, 1
        %s674 = scalar_lea.sflag [#allocation6], %s673
        %s675 = sand.u32 %s94, 1
        %s676 = smul.addr %s675, 8
        %s677 = scalar_lea.vmem [#allocation5], %s676
        %p678 = pneg %p107
        %p679 = pneg %p104
        %s680 = sand.u32 %s38, 1
        %s681 = scalar_lea.sflag [#allocation6], %s680
        %s682 = sand.u32 %s128, 1
        %s683 = smul.addr %s682, 8
        %s684 = scalar_lea.vmem [#allocation7], %s683
        %p685 = pneg %p141
        %p686 = pneg %p138
        %s687 = sand.u32 %s38, 1
        %s688 = scalar_lea.sflag [#allocation9], %s687
        %s689 = sand.u32 %s156, 1
        %s690 = smul.addr %s689, 8
        %s691 = scalar_lea.vmem [#allocation8], %s690
        %p692 = pneg %p169
        %p693 = pneg %p166
        %s694 = sand.u32 %s38, 1
        %s695 = scalar_lea.sflag [#allocation9], %s694
        %s696 = sand.u32 %s190, 1
        %s697 = smul.addr %s696, 8
        %s698 = scalar_lea.vmem [#allocation10], %s697
        %p699 = pneg %p203
        %p700 = pneg %p200
        %s701 = sand.u32 %s38, 1
        %s702 = scalar_lea.sflag [#allocation12], %s701
        %s703 = sand.u32 %s224, 1
        %s704 = smul.addr %s703, 8
        %s705 = scalar_lea.vmem [#allocation11], %s704
        %p706 = pneg %p237
        %p707 = pneg %p234
        %s708 = sand.u32 %s38, 1
        %s709 = scalar_lea.sflag [#allocation12], %s708
        %s710 = sand.u32 %s252, 1
        %s711 = smul.addr %s710, 8
        %s712 = scalar_lea.vmem [#allocation13], %s711
        %p713 = pneg %p265
        %p714 = pneg %p262
        %s715 = sand.u32 %s38, 1
        %s716 = scalar_lea.sflag [#allocation15], %s715
        %s717 = sand.u32 %s286, 1
        %s718 = smul.addr %s717, 8
        %s719 = scalar_lea.vmem [#allocation14], %s718
        %p720 = pneg %p299
        %p721 = pneg %p296
        %s722 = sand.u32 %s38, 1
        %s723 = scalar_lea.sflag [#allocation15], %s722
        %s724 = sand.u32 %s320, 1
        %s725 = smul.addr %s724, 8
        %s726 = scalar_lea.vmem [#allocation16], %s725
        %p727 = pneg %p333
        %p728 = pneg %p330
        %p729 = pneg %p361
        %p730 = pneg %p358
        %s731 = sand.u32 %s348, 1
        %s732 = scalar_lea.sflag [#allocation4], %s731
        %s733 = sand.u32 %s348, 1
        %s734 = smul.addr %s733, 8
        %s735 = scalar_lea.vmem [#allocation17], %s734
        %s736 = ssub.s32 %s43, 1
        %p737 = scmp.gt.s32.totalorder %s736, 0
        %s738 = scalar_select %p737, %s736, 0
        %s739 = sadd.s32 %s43, 1
        %p740 = scmp.lt.s32.totalorder %s739, 2
        %s741 = scalar_select %p740, %s739, 0
        %s742 = ssub.s32 %s43, 1
        %p743 = scmp.gt.s32.totalorder %s742, 0
        %s744 = scalar_select %p743, %s742, 0
        %s745 = sadd.s32 %s43, 1
        %p746 = scmp.lt.s32.totalorder %s745, 2
        %s747 = scalar_select %p746, %s745, 0
        %s748 = ssub.s32 %s43, 1
        %p749 = scmp.gt.s32.totalorder %s748, 0
        %s750 = scalar_select %p749, %s748, 0
        %s751 = sadd.s32 %s43, 1
        %p752 = scmp.lt.s32.totalorder %s751, 2
        %s753 = scalar_select %p752, %s751, 0
        %v754 = vlaneseq
        %v755 = vshrl.u32 %v754, 7
        %v756 = vlaneseq
        %v757 = vand.u32 %v756, 127
        %s758 = smul.u32 %s43, 8
        %s759 = ssub.s32 16, %s758
        %p760 = scmp.lt.s32.totalorder %s759, 8
        %s761 = scalar_select %p760, %s759, 8
        %p762 = scmp.gt.s32.totalorder %s43, 0
        %s763 = sadd.s32 %s43, 1
        %s764 = smul.u32 %s763, 8
        %p765 = scmp.lt.s32.totalorder %s764, 16
        %v766 = vld [vmem:[%s589] sm:$0xff]
        %v767 = vstv %s761
        %vm768 = vcmp.lt.s32.totalorder %v755, %v767
        %v769 = vsel %vm768, %v766, 0.0
        %v770 = vld [vmem:[%s598] sm:$0xff]
        %s771 = scalar_select %p762, 1, 0
        %v772 = vstv %s771
        %vm773 = vcmp.eq.s32.totalorder %v772, 1
        %v774 = vsel %vm773, %v770, 0.0
        %v775 = vld [vmem:[%s607] sm:$0xff]
        %s776 = scalar_select %p765, 1, 0
        %v777 = vstv %s776
        %vm778 = vcmp.eq.s32.totalorder %v777, 1
        %v779 = vsel %vm778, %v775, 0.0
        %vm780 = vcmp.eq.s32.totalorder %v755, 0
        %v781 = vrot.slane %v769, 7
        %v782 = vlaneseq
        %v783 = vshrl.u32 %v782, 7
        %v784 = vsub.s32 7, %v783
        %v785 = vrot.slane %v774, %v784
        %v786 = vsel %vm780, %v785, %v781
        %vm787 = vcmp.eq.s32.totalorder %v755, 7
        %v788 = vrot.slane %v769, 1
        %v789 = vlaneseq
        %v790 = vshrl.u32 %v789, 7
        %v791 = vsub.s32 0, %v790
        %v792 = vrot.slane %v779, %v791
        %v793 = vsel %vm787, %v792, %v788
        %v794 = vmul.f32 %v769, 2.0
        %v795 = vadd.f32 %v786, %v794
        %v796 = vadd.f32 %v795, %v793
        %v797 = vsub.f32 %v786, %v793
        %vm798 = vcmp.eq.s32.totalorder %v757, 127
        %799 = vrot.lane.b32.xlu0 %v796, 127
        %v800 = vpop.permute.xlu0 %799
        %v801 = vsel %vm798, 0.0, %v800
        %vm802 = vcmp.eq.s32.totalorder %v757, 0
        %803 = vrot.lane.b32.xlu0 %v796, 1
        %v804 = vpop.permute.xlu0 %803
        %v805 = vsel %vm802, 0.0, %v804
        %v806 = vsub.f32 %v801, %v805
        %807 = vrot.lane.b32.xlu0 %v797, 1
        %v808 = vpop.permute.xlu0 %807
        %v809 = vsel %vm802, 0.0, %v808
        %v810 = vmul.f32 %v797, 2.0
        %v811 = vadd.f32 %v809, %v810
        %812 = vrot.lane.b32.xlu0 %v797, 127
        %v813 = vpop.permute.xlu0 %812
        %v814 = vsel %vm798, 0.0, %v813
        %v815 = vadd.f32 %v811, %v814
        %v816 = vand.u32 2147483647, %v806
        %v817 = vand.u32 2147483647, %v815
        %v818 = vadd.f32 %v816, %v817
        %v819 = vld [vmem:[%s616] sm:$0xff]
        %v820 = vsel %vm768, %v819, 0.0
        %v821 = vld [vmem:[%s625] sm:$0xff]
        %v822 = vsel %vm773, %v821, 0.0
        %v823 = vld [vmem:[%s634] sm:$0xff]
        %v824 = vsel %vm778, %v823, 0.0
        %v825 = vrot.slane %v820, 7
        %v826 = vlaneseq
        %v827 = vshrl.u32 %v826, 7
        %v828 = vsub.s32 7, %v827
        %v829 = vrot.slane %v822, %v828
        %v830 = vsel %vm780, %v829, %v825
        %v831 = vrot.slane %v820, 1
        %v832 = vlaneseq
        %v833 = vshrl.u32 %v832, 7
        %v834 = vsub.s32 0, %v833
        %v835 = vrot.slane %v824, %v834
        %v836 = vsel %vm787, %v835, %v831
        %v837 = vmul.f32 %v820, 2.0
        %v838 = vadd.f32 %v830, %v837
        %v839 = vadd.f32 %v838, %v836
        %v840 = vsub.f32 %v830, %v836
        %841 = vrot.lane.b32.xlu0 %v839, 127
        %v842 = vpop.permute.xlu0 %841
        %v843 = vsel %vm798, 0.0, %v842
        %844 = vrot.lane.b32.xlu0 %v839, 1
        %v845 = vpop.permute.xlu0 %844
        %v846 = vsel %vm802, 0.0, %v845
        %v847 = vsub.f32 %v843, %v846
        %848 = vrot.lane.b32.xlu0 %v840, 1
        %v849 = vpop.permute.xlu0 %848
        %v850 = vsel %vm802, 0.0, %v849
        %v851 = vmul.f32 %v840, 2.0
        %v852 = vadd.f32 %v850, %v851
        %853 = vrot.lane.b32.xlu0 %v840, 127
        %v854 = vpop.permute.xlu0 %853
        %v855 = vsel %vm798, 0.0, %v854
        %v856 = vadd.f32 %v852, %v855
        %v857 = vand.u32 2147483647, %v847
        %v858 = vand.u32 2147483647, %v856
        %v859 = vadd.f32 %v857, %v858
        %v860 = vld [vmem:[%s643] sm:$0xff]
        %v861 = vsel %vm768, %v860, 0.0
        %v862 = vld [vmem:[%s652] sm:$0xff]
        %v863 = vsel %vm773, %v862, 0.0
        %v864 = vld [vmem:[%s661] sm:$0xff]
        %v865 = vsel %vm778, %v864, 0.0
        %v866 = vrot.slane %v861, 7
        %v867 = vlaneseq
        %v868 = vshrl.u32 %v867, 7
        %v869 = vsub.s32 7, %v868
        %v870 = vrot.slane %v863, %v869
        %v871 = vsel %vm780, %v870, %v866
        %v872 = vrot.slane %v861, 1
        %v873 = vlaneseq
        %v874 = vshrl.u32 %v873, 7
        %v875 = vsub.s32 0, %v874
        %v876 = vrot.slane %v865, %v875
        %v877 = vsel %vm787, %v876, %v872
        %v878 = vmul.f32 %v861, 2.0
        %v879 = vadd.f32 %v871, %v878
        %v880 = vadd.f32 %v879, %v877
        %v881 = vsub.f32 %v871, %v877
        %882 = vrot.lane.b32.xlu0 %v880, 127
        %v883 = vpop.permute.xlu0 %882
        %v884 = vsel %vm798, 0.0, %v883
        %885 = vrot.lane.b32.xlu0 %v880, 1
        %v886 = vpop.permute.xlu0 %885
        %v887 = vsel %vm802, 0.0, %v886
        %v888 = vsub.f32 %v884, %v887
        %889 = vrot.lane.b32.xlu0 %v881, 1
        %v890 = vpop.permute.xlu0 %889
        %v891 = vsel %vm802, 0.0, %v890
        %v892 = vmul.f32 %v881, 2.0
        %v893 = vadd.f32 %v891, %v892
        %894 = vrot.lane.b32.xlu0 %v881, 127
        %v895 = vpop.permute.xlu0 %894
        %v896 = vsel %vm798, 0.0, %v895
        %v897 = vadd.f32 %v893, %v896
        %v898 = vand.u32 2147483647, %v888
        %v899 = vand.u32 2147483647, %v897
        %v900 = vadd.f32 %v898, %v899
        %v901 = vmax.f32 %v818, %v859
        %v902 = vsub.f32 %v900, %v901
        %v903 = vand.u32 2147483647, %v902
        %vm904 = vcmp.lt.s32.totalorder %v757, 16
        %vm905 = vmand %vm768, %vm904
        %v906 = vsel %vm905, %v903, 0.0
        %907 = vadd.xlane.f32.xlu0 %v906
        %v908 = vpop.xlane.xlu0 %907
        %v909 = vrot.slane %v908, 4
        %v910 = vadd.f32 %v908, %v909
        %v911 = vrot.slane %v910, 2
        %v912 = vadd.f32 %v910, %v911
        %v913 = vrot.slane %v912, 1
        %v914 = vadd.f32 %v912, %v913
        %s915 = vtos %v914
        %v916 = vstv %s915
        %v917 = vadd.f32 %v916, 0.0
        %918 = vst [vmem:[%s735] sm:$0xff] %v917
        %s919 = sand.u32 %s348, 1
        %s920 = scalar_lea.sflag [#allocation4], %s919
        %s921 = sand.u32 %s348, 1
        %s922 = smul.addr %s921, 8
        %s923 = scalar_lea.vmem [#allocation17], %s922
        // Predicated region
        $region93: #{tpu_custom_call.1} parent=55 // pred_check
          %p924 = pneg %p358
        $region94: #{tpu_custom_call.1} parent=55 // pred_check_branch
          %926 = sbr.rel (%p924) target = $region96
        $region95: #{tpu_custom_call.1} parent=55 // pred_region
          %s928 = ssub.s32 128, 128
          %929 = vsyncadd %s920, %s928
          %s930 = smul.addr %s42, 2
          %s931 = sadd.s32 %s43, %s930
          %s932 = smul.addr %s931, 128
          %s933 = scalar_lea.hbm %s9, %s932
          %s935 = sshll.u32 %s923, 4
          %s936 = int_to_ptr.vmem [resolvable:$true] %s935
          %938 = dma.vmem_to_hbm [thread:$0]  %s936, 128, %s933, %s920
        $region96: #{tpu_custom_call.1} parent=55 // pred_fallthru
          _
      $region56: #{tpu_custom_call.1} parent=5 // pred_fallthru
        _
      %p939 = scmp.le.s32.totalorder 2, %s33
      // Predicated region
      $region97: #{tpu_custom_call.1} parent=5 // pred_check
        %p940 = pneg %p939
      $region98: #{tpu_custom_call.1} parent=5 // pred_check_branch
        %942 = sbr.rel (%p940) target = $region100
      $region99: #{tpu_custom_call.1} parent=5 // pred_region
        %s943 = ssub.s32 %s33, 2
        // Predicated region
        $region101: #{tpu_custom_call.1} parent=99 // pred_check
          %p944 = pneg %p364
        $region102: #{tpu_custom_call.1} parent=99 // pred_check_branch
          %946 = sbr.rel (%p944) target = $region104
        $region103: #{tpu_custom_call.1} parent=99 // pred_region
          %s947 = sand.u32 %s349, 1
          %s948 = scalar_lea.sflag [#allocation4], %s947
          %s949 = sand.u32 %s349, 1
          %s950 = smul.addr %s949, 8
          %s951 = scalar_lea.vmem [#allocation17], %s950
          %952 = dma.done %s948, 128
        $region104: #{tpu_custom_call.1} parent=99 // pred_fallthru
          _
      $region100: #{tpu_custom_call.1} parent=5 // pred_fallthru
        _
    $region6: #{tpu_custom_call.1} parent=1 // loop_footer
      %s37 = sadd.s32 1, %s33
    $region7: #{tpu_custom_call.1} parent=1 // loop_footer_branch
      %32 = sbr.rel target = $region3
    $region8: #{tpu_custom_call.1} parent=1 // loop_exit
      _
    %953 = vsyncpa [#allocation3], 1
    %s954 = scalar_lea.sflag [#allocation3], 1
    %955 = vsyncpa %s954, 1
    %956 = vsyncpa [#allocation6], 1
    %s957 = scalar_lea.sflag [#allocation6], 1
    %958 = vsyncpa %s957, 1
    %959 = vsyncpa [#allocation9], 1
    %s960 = scalar_lea.sflag [#allocation9], 1
    %961 = vsyncpa %s960, 1
    %962 = vsyncpa [#allocation12], 1
    %s963 = scalar_lea.sflag [#allocation12], 1
    %964 = vsyncpa %s963, 1
    %965 = vsyncpa [#allocation15], 1
    %s966 = scalar_lea.sflag [#allocation15], 1
    %967 = vsyncpa %s966, 1
    %968 = vsyncpa [#allocation4], 1
    %s969 = scalar_lea.sflag [#allocation4], 1
    %970 = vsyncpa %s969, 1

</llo_original>
